<compile_context>
chip_gen: v7x
topology: tpu7x:2x2x1
jax: 0.10.0
libtpu: 0.0.40
codegen_flags: <defaults>
</compile_context>

<pallas_src>
import functools

import jax
import jax.numpy as jnp
import numpy as np
from jax import lax
from jax.experimental import pallas as pl
from jax.experimental.pallas import tpu as pltpu


# ----------------------------------------------------------------------------
# Pallas kernel: full GRU recurrence + linear classification head,
# including both layout reorders (input batch->time, output time->batch).
# ----------------------------------------------------------------------------
def _sst_segact_kernel(perm_tm_ref, perm_bm_ref, x_ref,
                       w_ih_ref, w_hh_ref, b_fused_ref, b_hn_ref,
                       w_out_ref, b_out_ref,
                       rnn_out_ref, fin_out_ref):
    N, L, I = x_ref.shape
    H = w_hh_ref.shape[0]

    w_ih = w_ih_ref[...]        # (I, 3H)  gates fused along lanes (r|z|n)
    w_hh = w_hh_ref[...]        # (H, 3H)
    b_fused = b_fused_ref[...]  # (1, 3H)  = [b_ir+b_hr | b_iz+b_hz | b_in]
    b_hn = b_hn_ref[...]        # (1, H)   kept separate (sits inside r*(...))
    w_out = w_out_ref[...]      # (H, C)
    b_out = b_out_ref[...]      # (1, C)

    # Batch-major rows (n*L + t) -> time-major rows (t*N + n) via a constant
    # permutation matmul on the MXU (exact in f32, off the serial path).
    x_bm = x_ref[...].reshape(N * L, I)
    x_tm = jnp.dot(perm_tm_ref[...], x_bm, preferred_element_type=jnp.float32)

    # Hoisted input projection: one big matmul off the serial path, biases folded.
    gi = jnp.dot(x_tm, w_ih, preferred_element_type=jnp.float32) + b_fused
    gi3 = gi.reshape(L, N, 3 * H)                                   # (L, N, 3H)

    # Serial recurrence: h lives in vregs; one (N,H)@(H,3H) matmul per step.
    # h_t goes straight to rnn_out_ref[t] (vst slot, overlaps next step's MXU work).
    h = jnp.zeros((N, H), jnp.float32)
    for t in range(L):                                              # static unroll (L small)
        gi_t = gi3[t]                                               # (N, 3H) static slice
        gh = jnp.dot(h, w_hh, preferred_element_type=jnp.float32)   # (N, 3H)
        rz = jax.nn.sigmoid(gi_t[:, 0:2 * H] + gh[:, 0:2 * H])      # fused r|z sigmoid
        r = rz[:, 0:H]
        z = rz[:, H:2 * H]
        n = jnp.tanh(gi_t[:, 2 * H:] + r * (gh[:, 2 * H:] + b_hn))
        h = (1.0 - z) * n + z * h
        rnn_out_ref[t] = h.astype(rnn_out_ref.dtype)                # per-step store

    # Linear head once over the whole sequence (off the serial path), then the
    # time-major -> batch-major row reorder (constant permutation matmul) so the
    # kernel writes fin_out in its final (N*L, C) order directly.
    flat_tm = rnn_out_ref[...].reshape(L * N, H)
    logits_tm = jnp.dot(flat_tm, w_out, preferred_element_type=jnp.float32) + b_out
    fin = jnp.dot(perm_bm_ref[...], logits_tm, preferred_element_type=jnp.float32)
    fin_out_ref[...] = fin.astype(fin_out_ref.dtype)


# ----------------------------------------------------------------------------
# Wrapper: pure pallas_call plumbing — no layout HLOs outside the kernel.
# ----------------------------------------------------------------------------
@functools.lru_cache(maxsize=None)
def _row_perms(batch, seq):
    """Row-permutation matrices between batch-major (n*L+t) and time-major (t*N+n)."""
    LN = batch * seq
    p_tm = np.zeros((LN, LN), np.float32)   # time-major  <- batch-major
    for n in range(batch):
        for t in range(seq):
            p_tm[t * batch + n, n * seq + t] = 1.0
    p_bm = p_tm.T.copy()                    # batch-major <- time-major
    return jnp.asarray(p_tm), jnp.asarray(p_bm)


def sst_ad_segact_forward(inputs, params):
    """inputs: (N, L, I) batch-first, like the PyTorch module's `forward`."""
    N, L, I = inputs.shape
    H = params["w_hh_f"].shape[0]
    C = params["w_out_T"].shape[1]
    perm_tm, perm_bm = _row_perms(N, L)

    rnn_out, fin_out = pl.pallas_call(
        _sst_segact_kernel,
        out_shape=(
            jax.ShapeDtypeStruct((L, N, H), jnp.float32),   # rnn_output (time-major)
            jax.ShapeDtypeStruct((N * L, C), jnp.float32),  # fin_out, final row order
        ),
        in_specs=[pl.BlockSpec(memory_space=pltpu.MemorySpace.VMEM)] * 9,
        out_specs=(
            pl.BlockSpec(memory_space=pltpu.MemorySpace.VMEM),
            pl.BlockSpec(memory_space=pltpu.MemorySpace.VMEM),
        ),
    )(perm_tm, perm_bm, inputs.astype(jnp.float32),
      params["w_ih_f"], params["w_hh_f"], params["b_fused"], params["b_hn"],
      params["w_out_T"], params["b_out_2d"])

    return fin_out, rnn_out


# ----------------------------------------------------------------------------
# Deterministic parameter construction (PyTorch-style) + pure-JAX reference.
# ----------------------------------------------------------------------------
def make_params(key, input_size, h_width, num_classes):
    ks = jax.random.split(key, 6)
    bound = 1.0 / np.sqrt(h_width)
    # PyTorch-native layouts:
    w_ih = jax.random.uniform(ks[0], (3 * h_width, input_size), jnp.float32, -bound, bound)
    w_hh = jax.random.uniform(ks[1], (3 * h_width, h_width), jnp.float32, -bound, bound)
    b_ih = jax.random.uniform(ks[2], (3 * h_width,), jnp.float32, -bound, bound)
    b_hh = jax.random.uniform(ks[3], (3 * h_width,), jnp.float32, -bound, bound)
    w_out = jax.random.uniform(ks[4], (num_classes, h_width), jnp.float32, -bound, bound)
    b_out = jax.random.uniform(ks[5], (num_classes,), jnp.float32, -bound, bound)

    H = h_width
    # Fused bias: r/z biases pre-summed, b_in folded, b_hn kept separate.
    b_fused = b_ih + jnp.concatenate([b_hh[:2 * H], jnp.zeros((H,), jnp.float32)])

    params = {
        # kernel-friendly layouts (gates fused along the output/lane dim)
        "w_ih_f": jnp.transpose(w_ih, (1, 0)),                     # (I, 3H)
        "w_hh_f": jnp.transpose(w_hh, (1, 0)),                     # (H, 3H)
        "b_fused": b_fused.reshape(1, 3 * H),                      # (1, 3H)
        "b_hn": b_hh[2 * H:].reshape(1, H),                        # (1, H)
        "w_out_T": jnp.transpose(w_out, (1, 0)),                   # (H, C)
        "b_out_2d": b_out.reshape(1, num_classes),                 # (1, C)
        # PyTorch-native copies for the reference
        "_w_ih": w_ih, "_w_hh": w_hh, "_b_ih": b_ih, "_b_hh": b_hh,
        "_w_out": w_out, "_b_out": b_out,
    }
    return params


def reference_forward(inputs, params, h_width):
    """Pure-JAX reference following torch.nn.GRU / nn.Linear semantics exactly."""
    N, L, I = inputs.shape
    H = h_width
    w_ih, w_hh = params["_w_ih"], params["_w_hh"]
    b_ih, b_hh = params["_b_ih"], params["_b_hh"]
    w_out, b_out = params["_w_out"], params["_b_out"]

    x = jnp.transpose(inputs, (1, 0, 2)).astype(jnp.float32)       # (L, N, I)
    h0 = jnp.zeros((N, H), jnp.float32)

    def cell(h_prev, x_t):
        gi = x_t @ w_ih.T + b_ih
        gh = h_prev @ w_hh.T + b_hh
        r = jax.nn.sigmoid(gi[:, 0:H] + gh[:, 0:H])
        z = jax.nn.sigmoid(gi[:, H:2 * H] + gh[:, H:2 * H])
        n = jnp.tanh(gi[:, 2 * H:3 * H] + r * gh[:, 2 * H:3 * H])
        h_new = (1.0 - z) * n + z * h_prev
        return h_new, h_new

    _, rnn_out = lax.scan(cell, h0, x)                             # (L, N, H)
    out = rnn_out.reshape(L * N, H) @ w_out.T + b_out              # (L*N, C)
    C = out.shape[1]
    fin = jnp.transpose(out.reshape(L, N, C), (1, 0, 2)).reshape(N * L, C)
    return fin, rnn_out


# TODO(synk): self.nonlin_eval (Softmax in obtain_class_scores) is not part of
# forward() and is therefore not included in the kernel.

if __name__ == "__main__":
    # Small shapes consistent with the module: batch=2, seq=8, input=32, hidden=32, classes=8.
    N, L, I, H, C = 2, 8, 32, 32, 8

    key = jax.random.PRNGKey(0)
    k_x, k_p = jax.random.split(key)
    inputs = jax.random.normal(k_x, (N, L, I), jnp.float32)        # (batch, seq, feat)
    params = make_params(k_p, input_size=I, h_width=H, num_classes=C)

    fin_out, rnn_out = sst_ad_segact_forward(inputs, params)
    jax.block_until_ready((fin_out, rnn_out))

    fin_ref, rnn_ref = reference_forward(inputs, params, h_width=H)
    np.testing.assert_allclose(np.asarray(rnn_out), np.asarray(rnn_ref), rtol=1e-5, atol=1e-5)
    np.testing.assert_allclose(np.asarray(fin_out), np.asarray(fin_ref), rtol=1e-5, atol=1e-5)

    assert fin_out.shape == (N * L, C)
    assert rnn_out.shape == (L, N, H)
    print("KERNEL_OK")
</pallas_src>

<mosaic_0001>
module attributes {stable_mosaic.version = 11 : i64} {
  func.func @_sst_segact_kernel(%arg0: memref<16x16xf32, #tpu.memory_space<vmem>>, %arg1: memref<16x16xf32, #tpu.memory_space<vmem>>, %arg2: memref<2x8x32xf32, #tpu.memory_space<vmem>>, %arg3: memref<32x96xf32, #tpu.memory_space<vmem>>, %arg4: memref<32x96xf32, #tpu.memory_space<vmem>>, %arg5: memref<1x96xf32, #tpu.memory_space<vmem>>, %arg6: memref<1x32xf32, #tpu.memory_space<vmem>>, %arg7: memref<32x8xf32, #tpu.memory_space<vmem>>, %arg8: memref<1x8xf32, #tpu.memory_space<vmem>>, %arg9: memref<8x2x32xf32, #tpu.memory_space<vmem>>, %arg10: memref<16x8xf32, #tpu.memory_space<vmem>>) attributes {dimension_semantics = [], scalar_prefetch = 0 : i64, scratch_operands = 0 : i64, tpu.core_type = #tpu.core_type<tc>} {
    %c0 = arith.constant 0 : index
    %c0_0 = arith.constant 0 : index
    %0 = vector.load %arg3[%c0, %c0_0] : memref<32x96xf32, #tpu.memory_space<vmem>>, vector<32x96xf32>
    %c0_1 = arith.constant 0 : index
    %c0_2 = arith.constant 0 : index
    %1 = vector.load %arg4[%c0_1, %c0_2] : memref<32x96xf32, #tpu.memory_space<vmem>>, vector<32x96xf32>
    %c0_3 = arith.constant 0 : index
    %c0_4 = arith.constant 0 : index
    %2 = vector.load %arg5[%c0_3, %c0_4] : memref<1x96xf32, #tpu.memory_space<vmem>>, vector<1x96xf32>
    %c0_5 = arith.constant 0 : index
    %c0_6 = arith.constant 0 : index
    %3 = vector.load %arg6[%c0_5, %c0_6] : memref<1x32xf32, #tpu.memory_space<vmem>>, vector<1x32xf32>
    %c0_7 = arith.constant 0 : index
    %c0_8 = arith.constant 0 : index
    %4 = vector.load %arg7[%c0_7, %c0_8] : memref<32x8xf32, #tpu.memory_space<vmem>>, vector<32x8xf32>
    %c0_9 = arith.constant 0 : index
    %c0_10 = arith.constant 0 : index
    %5 = vector.load %arg8[%c0_9, %c0_10] : memref<1x8xf32, #tpu.memory_space<vmem>>, vector<1x8xf32>
    %c0_11 = arith.constant 0 : index
    %c0_12 = arith.constant 0 : index
    %c0_13 = arith.constant 0 : index
    %6 = vector.load %arg2[%c0_11, %c0_12, %c0_13] : memref<2x8x32xf32, #tpu.memory_space<vmem>>, vector<2x8x32xf32>
    %7 = vector.shape_cast %6 : vector<2x8x32xf32> to vector<16x32xf32>
    %c0_14 = arith.constant 0 : index
    %c0_15 = arith.constant 0 : index
    %8 = vector.load %arg0[%c0_14, %c0_15] : memref<16x16xf32, #tpu.memory_space<vmem>>, vector<16x16xf32>
    %cst = arith.constant dense<0.000000e+00> : vector<16x32xf32>
    %9 = tpu.matmul %8, %7, %cst {dimension_numbers = #tpu.dot_dimension_numbers<[1], [0], [0], [1], [0, 0, 1, 1], [], []>} : vector<16x16xf32>, vector<16x32xf32>, vector<16x32xf32> -> vector<16x32xf32>
    %cst_16 = arith.constant dense<0.000000e+00> : vector<16x96xf32>
    %10 = tpu.matmul %9, %0, %cst_16 {dimension_numbers = #tpu.dot_dimension_numbers<[1], [0], [0], [1], [0, 0, 1, 1], [], []>} : vector<16x32xf32>, vector<32x96xf32>, vector<16x96xf32> -> vector<16x96xf32>
    %11 = vector.broadcast %2 : vector<1x96xf32> to vector<16x96xf32>
    %12 = arith.addf %10, %11 : vector<16x96xf32>
    %13 = vector.shape_cast %12 : vector<16x96xf32> to vector<8x2x96xf32>
    %cst_17 = arith.constant 0.000000e+00 : f32
    %14 = vector.broadcast %cst_17 : f32 to vector<2x32xf32>
    %15 = vector.extract_strided_slice %13 {offsets = [0, 0, 0], sizes = [1, 2, 96], strides = [1, 1, 1]} : vector<8x2x96xf32> to vector<1x2x96xf32>
    %16 = vector.shape_cast %15 : vector<1x2x96xf32> to vector<2x96xf32>
    %cst_18 = arith.constant dense<0.000000e+00> : vector<2x96xf32>
    %17 = tpu.matmul %14, %1, %cst_18 {dimension_numbers = #tpu.dot_dimension_numbers<[1], [0], [0], [1], [0, 0, 1, 1], [], []>} : vector<2x32xf32>, vector<32x96xf32>, vector<2x96xf32> -> vector<2x96xf32>
    %18 = vector.extract_strided_slice %16 {offsets = [0, 0], sizes = [2, 64], strides = [1, 1]} : vector<2x96xf32> to vector<2x64xf32>
    %19 = vector.extract_strided_slice %17 {offsets = [0, 0], sizes = [2, 64], strides = [1, 1]} : vector<2x96xf32> to vector<2x64xf32>
    %20 = arith.addf %18, %19 : vector<2x64xf32>
    %21 = arith.negf %20 : vector<2x64xf32>
    %22 = math.exp %21 : vector<2x64xf32>
    %cst_19 = arith.constant 1.000000e+00 : f32
    %23 = vector.broadcast %cst_19 : f32 to vector<2x64xf32>
    %24 = arith.addf %23, %22 : vector<2x64xf32>
    %25 = arith.divf %23, %24 : vector<2x64xf32>
    %26 = vector.extract_strided_slice %25 {offsets = [0, 0], sizes = [2, 32], strides = [1, 1]} : vector<2x64xf32> to vector<2x32xf32>
    %27 = vector.extract_strided_slice %25 {offsets = [0, 32], sizes = [2, 32], strides = [1, 1]} : vector<2x64xf32> to vector<2x32xf32>
    %28 = vector.extract_strided_slice %16 {offsets = [0, 64], sizes = [2, 32], strides = [1, 1]} : vector<2x96xf32> to vector<2x32xf32>
    %29 = vector.extract_strided_slice %17 {offsets = [0, 64], sizes = [2, 32], strides = [1, 1]} : vector<2x96xf32> to vector<2x32xf32>
    %30 = vector.broadcast %3 : vector<1x32xf32> to vector<2x32xf32>
    %31 = arith.addf %29, %30 : vector<2x32xf32>
    %32 = arith.mulf %26, %31 : vector<2x32xf32>
    %33 = arith.addf %28, %32 : vector<2x32xf32>
    %34 = math.tanh %33 : vector<2x32xf32>
    %cst_20 = arith.constant 1.000000e+00 : f32
    %35 = vector.broadcast %cst_20 : f32 to vector<2x32xf32>
    %36 = arith.subf %35, %27 : vector<2x32xf32>
    %37 = arith.mulf %36, %34 : vector<2x32xf32>
    %38 = arith.mulf %27, %14 : vector<2x32xf32>
    %39 = arith.addf %37, %38 : vector<2x32xf32>
    %c0_21 = arith.constant 0 : index
    %c0_22 = arith.constant 0 : index
    %c0_23 = arith.constant 0 : index
    %40 = vector.load %arg9[%c0_21, %c0_22, %c0_23] : memref<8x2x32xf32, #tpu.memory_space<vmem>>, vector<1x2x32xf32>
    %41 = vector.shape_cast %40 : vector<1x2x32xf32> to vector<2x32xf32>
    %42 = vector.shape_cast %39 : vector<2x32xf32> to vector<1x2x32xf32>
    tpu.vector_store %arg9[%c0_21, %c0_22, %c0_23], %42 {strides = array<i32>} : memref<8x2x32xf32, #tpu.memory_space<vmem>>, vector<1x2x32xf32>,
    %43 = vector.extract_strided_slice %13 {offsets = [1, 0, 0], sizes = [1, 2, 96], strides = [1, 1, 1]} : vector<8x2x96xf32> to vector<1x2x96xf32>
    %44 = vector.shape_cast %43 : vector<1x2x96xf32> to vector<2x96xf32>
    %cst_24 = arith.constant dense<0.000000e+00> : vector<2x96xf32>
    %45 = tpu.matmul %39, %1, %cst_24 {dimension_numbers = #tpu.dot_dimension_numbers<[1], [0], [0], [1], [0, 0, 1, 1], [], []>} : vector<2x32xf32>, vector<32x96xf32>, vector<2x96xf32> -> vector<2x96xf32>
    %46 = vector.extract_strided_slice %44 {offsets = [0, 0], sizes = [2, 64], strides = [1, 1]} : vector<2x96xf32> to vector<2x64xf32>
    %47 = vector.extract_strided_slice %45 {offsets = [0, 0], sizes = [2, 64], strides = [1, 1]} : vector<2x96xf32> to vector<2x64xf32>
    %48 = arith.addf %46, %47 : vector<2x64xf32>
    %49 = arith.negf %48 : vector<2x64xf32>
    %50 = math.exp %49 : vector<2x64xf32>
    %cst_25 = arith.constant 1.000000e+00 : f32
    %51 = vector.broadcast %cst_25 : f32 to vector<2x64xf32>
    %52 = arith.addf %51, %50 : vector<2x64xf32>
    %53 = arith.divf %51, %52 : vector<2x64xf32>
    %54 = vector.extract_strided_slice %53 {offsets = [0, 0], sizes = [2, 32], strides = [1, 1]} : vector<2x64xf32> to vector<2x32xf32>
    %55 = vector.extract_strided_slice %53 {offsets = [0, 32], sizes = [2, 32], strides = [1, 1]} : vector<2x64xf32> to vector<2x32xf32>
    %56 = vector.extract_strided_slice %44 {offsets = [0, 64], sizes = [2, 32], strides = [1, 1]} : vector<2x96xf32> to vector<2x32xf32>
    %57 = vector.extract_strided_slice %45 {offsets = [0, 64], sizes = [2, 32], strides = [1, 1]} : vector<2x96xf32> to vector<2x32xf32>
    %58 = vector.broadcast %3 : vector<1x32xf32> to vector<2x32xf32>
    %59 = arith.addf %57, %58 : vector<2x32xf32>
    %60 = arith.mulf %54, %59 : vector<2x32xf32>
    %61 = arith.addf %56, %60 : vector<2x32xf32>
    %62 = math.tanh %61 : vector<2x32xf32>
    %cst_26 = arith.constant 1.000000e+00 : f32
    %63 = vector.broadcast %cst_26 : f32 to vector<2x32xf32>
    %64 = arith.subf %63, %55 : vector<2x32xf32>
    %65 = arith.mulf %64, %62 : vector<2x32xf32>
    %66 = arith.mulf %55, %39 : vector<2x32xf32>
    %67 = arith.addf %65, %66 : vector<2x32xf32>
    %c1 = arith.constant 1 : index
    %c0_27 = arith.constant 0 : index
    %c0_28 = arith.constant 0 : index
    %68 = vector.load %arg9[%c1, %c0_27, %c0_28] : memref<8x2x32xf32, #tpu.memory_space<vmem>>, vector<1x2x32xf32>
    %69 = vector.shape_cast %68 : vector<1x2x32xf32> to vector<2x32xf32>
    %70 = vector.shape_cast %67 : vector<2x32xf32> to vector<1x2x32xf32>
    tpu.vector_store %arg9[%c1, %c0_27, %c0_28], %70 {strides = array<i32>} : memref<8x2x32xf32, #tpu.memory_space<vmem>>, vector<1x2x32xf32>,
    %71 = vector.extract_strided_slice %13 {offsets = [2, 0, 0], sizes = [1, 2, 96], strides = [1, 1, 1]} : vector<8x2x96xf32> to vector<1x2x96xf32>
    %72 = vector.shape_cast %71 : vector<1x2x96xf32> to vector<2x96xf32>
    %cst_29 = arith.constant dense<0.000000e+00> : vector<2x96xf32>
    %73 = tpu.matmul %67, %1, %cst_29 {dimension_numbers = #tpu.dot_dimension_numbers<[1], [0], [0], [1], [0, 0, 1, 1], [], []>} : vector<2x32xf32>, vector<32x96xf32>, vector<2x96xf32> -> vector<2x96xf32>
    %74 = vector.extract_strided_slice %72 {offsets = [0, 0], sizes = [2, 64], strides = [1, 1]} : vector<2x96xf32> to vector<2x64xf32>
    %75 = vector.extract_strided_slice %73 {offsets = [0, 0], sizes = [2, 64], strides = [1, 1]} : vector<2x96xf32> to vector<2x64xf32>
    %76 = arith.addf %74, %75 : vector<2x64xf32>
    %77 = arith.negf %76 : vector<2x64xf32>
    %78 = math.exp %77 : vector<2x64xf32>
    %cst_30 = arith.constant 1.000000e+00 : f32
    %79 = vector.broadcast %cst_30 : f32 to vector<2x64xf32>
    %80 = arith.addf %79, %78 : vector<2x64xf32>
    %81 = arith.divf %79, %80 : vector<2x64xf32>
    %82 = vector.extract_strided_slice %81 {offsets = [0, 0], sizes = [2, 32], strides = [1, 1]} : vector<2x64xf32> to vector<2x32xf32>
    %83 = vector.extract_strided_slice %81 {offsets = [0, 32], sizes = [2, 32], strides = [1, 1]} : vector<2x64xf32> to vector<2x32xf32>
    %84 = vector.extract_strided_slice %72 {offsets = [0, 64], sizes = [2, 32], strides = [1, 1]} : vector<2x96xf32> to vector<2x32xf32>
    %85 = vector.extract_strided_slice %73 {offsets = [0, 64], sizes = [2, 32], strides = [1, 1]} : vector<2x96xf32> to vector<2x32xf32>
    %86 = vector.broadcast %3 : vector<1x32xf32> to vector<2x32xf32>
    %87 = arith.addf %85, %86 : vector<2x32xf32>
    %88 = arith.mulf %82, %87 : vector<2x32xf32>
    %89 = arith.addf %84, %88 : vector<2x32xf32>
    %90 = math.tanh %89 : vector<2x32xf32>
    %cst_31 = arith.constant 1.000000e+00 : f32
    %91 = vector.broadcast %cst_31 : f32 to vector<2x32xf32>
    %92 = arith.subf %91, %83 : vector<2x32xf32>
    %93 = arith.mulf %92, %90 : vector<2x32xf32>
    %94 = arith.mulf %83, %67 : vector<2x32xf32>
    %95 = arith.addf %93, %94 : vector<2x32xf32>
    %c2 = arith.constant 2 : index
    %c0_32 = arith.constant 0 : index
    %c0_33 = arith.constant 0 : index
    %96 = vector.load %arg9[%c2, %c0_32, %c0_33] : memref<8x2x32xf32, #tpu.memory_space<vmem>>, vector<1x2x32xf32>
    %97 = vector.shape_cast %96 : vector<1x2x32xf32> to vector<2x32xf32>
    %98 = vector.shape_cast %95 : vector<2x32xf32> to vector<1x2x32xf32>
    tpu.vector_store %arg9[%c2, %c0_32, %c0_33], %98 {strides = array<i32>} : memref<8x2x32xf32, #tpu.memory_space<vmem>>, vector<1x2x32xf32>,
    %99 = vector.extract_strided_slice %13 {offsets = [3, 0, 0], sizes = [1, 2, 96], strides = [1, 1, 1]} : vector<8x2x96xf32> to vector<1x2x96xf32>
    %100 = vector.shape_cast %99 : vector<1x2x96xf32> to vector<2x96xf32>
    %cst_34 = arith.constant dense<0.000000e+00> : vector<2x96xf32>
    %101 = tpu.matmul %95, %1, %cst_34 {dimension_numbers = #tpu.dot_dimension_numbers<[1], [0], [0], [1], [0, 0, 1, 1], [], []>} : vector<2x32xf32>, vector<32x96xf32>, vector<2x96xf32> -> vector<2x96xf32>
    %102 = vector.extract_strided_slice %100 {offsets = [0, 0], sizes = [2, 64], strides = [1, 1]} : vector<2x96xf32> to vector<2x64xf32>
    %103 = vector.extract_strided_slice %101 {offsets = [0, 0], sizes = [2, 64], strides = [1, 1]} : vector<2x96xf32> to vector<2x64xf32>
    %104 = arith.addf %102, %103 : vector<2x64xf32>
    %105 = arith.negf %104 : vector<2x64xf32>
    %106 = math.exp %105 : vector<2x64xf32>
    %cst_35 = arith.constant 1.000000e+00 : f32
    %107 = vector.broadcast %cst_35 : f32 to vector<2x64xf32>
    %108 = arith.addf %107, %106 : vector<2x64xf32>
    %109 = arith.divf %107, %108 : vector<2x64xf32>
    %110 = vector.extract_strided_slice %109 {offsets = [0, 0], sizes = [2, 32], strides = [1, 1]} : vector<2x64xf32> to vector<2x32xf32>
    %111 = vector.extract_strided_slice %109 {offsets = [0, 32], sizes = [2, 32], strides = [1, 1]} : vector<2x64xf32> to vector<2x32xf32>
    %112 = vector.extract_strided_slice %100 {offsets = [0, 64], sizes = [2, 32], strides = [1, 1]} : vector<2x96xf32> to vector<2x32xf32>
    %113 = vector.extract_strided_slice %101 {offsets = [0, 64], sizes = [2, 32], strides = [1, 1]} : vector<2x96xf32> to vector<2x32xf32>
    %114 = vector.broadcast %3 : vector<1x32xf32> to vector<2x32xf32>
    %115 = arith.addf %113, %114 : vector<2x32xf32>
    %116 = arith.mulf %110, %115 : vector<2x32xf32>
    %117 = arith.addf %112, %116 : vector<2x32xf32>
    %118 = math.tanh %117 : vector<2x32xf32>
    %cst_36 = arith.constant 1.000000e+00 : f32
    %119 = vector.broadcast %cst_36 : f32 to vector<2x32xf32>
    %120 = arith.subf %119, %111 : vector<2x32xf32>
    %121 = arith.mulf %120, %118 : vector<2x32xf32>
    %122 = arith.mulf %111, %95 : vector<2x32xf32>
    %123 = arith.addf %121, %122 : vector<2x32xf32>
    %c3 = arith.constant 3 : index
    %c0_37 = arith.constant 0 : index
    %c0_38 = arith.constant 0 : index
    %124 = vector.load %arg9[%c3, %c0_37, %c0_38] : memref<8x2x32xf32, #tpu.memory_space<vmem>>, vector<1x2x32xf32>
    %125 = vector.shape_cast %124 : vector<1x2x32xf32> to vector<2x32xf32>
    %126 = vector.shape_cast %123 : vector<2x32xf32> to vector<1x2x32xf32>
    tpu.vector_store %arg9[%c3, %c0_37, %c0_38], %126 {strides = array<i32>} : memref<8x2x32xf32, #tpu.memory_space<vmem>>, vector<1x2x32xf32>,
    %127 = vector.extract_strided_slice %13 {offsets = [4, 0, 0], sizes = [1, 2, 96], strides = [1, 1, 1]} : vector<8x2x96xf32> to vector<1x2x96xf32>
    %128 = vector.shape_cast %127 : vector<1x2x96xf32> to vector<2x96xf32>
    %cst_39 = arith.constant dense<0.000000e+00> : vector<2x96xf32>
    %129 = tpu.matmul %123, %1, %cst_39 {dimension_numbers = #tpu.dot_dimension_numbers<[1], [0], [0], [1], [0, 0, 1, 1], [], []>} : vector<2x32xf32>, vector<32x96xf32>, vector<2x96xf32> -> vector<2x96xf32>
    %130 = vector.extract_strided_slice %128 {offsets = [0, 0], sizes = [2, 64], strides = [1, 1]} : vector<2x96xf32> to vector<2x64xf32>
    %131 = vector.extract_strided_slice %129 {offsets = [0, 0], sizes = [2, 64], strides = [1, 1]} : vector<2x96xf32> to vector<2x64xf32>
    %132 = arith.addf %130, %131 : vector<2x64xf32>
    %133 = arith.negf %132 : vector<2x64xf32>
    %134 = math.exp %133 : vector<2x64xf32>
    %cst_40 = arith.constant 1.000000e+00 : f32
    %135 = vector.broadcast %cst_40 : f32 to vector<2x64xf32>
    %136 = arith.addf %135, %134 : vector<2x64xf32>
    %137 = arith.divf %135, %136 : vector<2x64xf32>
    %138 = vector.extract_strided_slice %137 {offsets = [0, 0], sizes = [2, 32], strides = [1, 1]} : vector<2x64xf32> to vector<2x32xf32>
    %139 = vector.extract_strided_slice %137 {offsets = [0, 32], sizes = [2, 32], strides = [1, 1]} : vector<2x64xf32> to vector<2x32xf32>
    %140 = vector.extract_strided_slice %128 {offsets = [0, 64], sizes = [2, 32], strides = [1, 1]} : vector<2x96xf32> to vector<2x32xf32>
    %141 = vector.extract_strided_slice %129 {offsets = [0, 64], sizes = [2, 32], strides = [1, 1]} : vector<2x96xf32> to vector<2x32xf32>
    %142 = vector.broadcast %3 : vector<1x32xf32> to vector<2x32xf32>
    %143 = arith.addf %141, %142 : vector<2x32xf32>
    %144 = arith.mulf %138, %143 : vector<2x32xf32>
    %145 = arith.addf %140, %144 : vector<2x32xf32>
    %146 = math.tanh %145 : vector<2x32xf32>
    %cst_41 = arith.constant 1.000000e+00 : f32
    %147 = vector.broadcast %cst_41 : f32 to vector<2x32xf32>
    %148 = arith.subf %147, %139 : vector<2x32xf32>
    %149 = arith.mulf %148, %146 : vector<2x32xf32>
    %150 = arith.mulf %139, %123 : vector<2x32xf32>
    %151 = arith.addf %149, %150 : vector<2x32xf32>
    %c4 = arith.constant 4 : index
    %c0_42 = arith.constant 0 : index
    %c0_43 = arith.constant 0 : index
    %152 = vector.load %arg9[%c4, %c0_42, %c0_43] : memref<8x2x32xf32, #tpu.memory_space<vmem>>, vector<1x2x32xf32>
    %153 = vector.shape_cast %152 : vector<1x2x32xf32> to vector<2x32xf32>
    %154 = vector.shape_cast %151 : vector<2x32xf32> to vector<1x2x32xf32>
    tpu.vector_store %arg9[%c4, %c0_42, %c0_43], %154 {strides = array<i32>} : memref<8x2x32xf32, #tpu.memory_space<vmem>>, vector<1x2x32xf32>,
    %155 = vector.extract_strided_slice %13 {offsets = [5, 0, 0], sizes = [1, 2, 96], strides = [1, 1, 1]} : vector<8x2x96xf32> to vector<1x2x96xf32>
    %156 = vector.shape_cast %155 : vector<1x2x96xf32> to vector<2x96xf32>
    %cst_44 = arith.constant dense<0.000000e+00> : vector<2x96xf32>
    %157 = tpu.matmul %151, %1, %cst_44 {dimension_numbers = #tpu.dot_dimension_numbers<[1], [0], [0], [1], [0, 0, 1, 1], [], []>} : vector<2x32xf32>, vector<32x96xf32>, vector<2x96xf32> -> vector<2x96xf32>
    %158 = vector.extract_strided_slice %156 {offsets = [0, 0], sizes = [2, 64], strides = [1, 1]} : vector<2x96xf32> to vector<2x64xf32>
    %159 = vector.extract_strided_slice %157 {offsets = [0, 0], sizes = [2, 64], strides = [1, 1]} : vector<2x96xf32> to vector<2x64xf32>
    %160 = arith.addf %158, %159 : vector<2x64xf32>
    %161 = arith.negf %160 : vector<2x64xf32>
    %162 = math.exp %161 : vector<2x64xf32>
    %cst_45 = arith.constant 1.000000e+00 : f32
    %163 = vector.broadcast %cst_45 : f32 to vector<2x64xf32>
    %164 = arith.addf %163, %162 : vector<2x64xf32>
    %165 = arith.divf %163, %164 : vector<2x64xf32>
    %166 = vector.extract_strided_slice %165 {offsets = [0, 0], sizes = [2, 32], strides = [1, 1]} : vector<2x64xf32> to vector<2x32xf32>
    %167 = vector.extract_strided_slice %165 {offsets = [0, 32], sizes = [2, 32], strides = [1, 1]} : vector<2x64xf32> to vector<2x32xf32>
    %168 = vector.extract_strided_slice %156 {offsets = [0, 64], sizes = [2, 32], strides = [1, 1]} : vector<2x96xf32> to vector<2x32xf32>
    %169 = vector.extract_strided_slice %157 {offsets = [0, 64], sizes = [2, 32], strides = [1, 1]} : vector<2x96xf32> to vector<2x32xf32>
    %170 = vector.broadcast %3 : vector<1x32xf32> to vector<2x32xf32>
    %171 = arith.addf %169, %170 : vector<2x32xf32>
    %172 = arith.mulf %166, %171 : vector<2x32xf32>
    %173 = arith.addf %168, %172 : vector<2x32xf32>
    %174 = math.tanh %173 : vector<2x32xf32>
    %cst_46 = arith.constant 1.000000e+00 : f32
    %175 = vector.broadcast %cst_46 : f32 to vector<2x32xf32>
    %176 = arith.subf %175, %167 : vector<2x32xf32>
    %177 = arith.mulf %176, %174 : vector<2x32xf32>
    %178 = arith.mulf %167, %151 : vector<2x32xf32>
    %179 = arith.addf %177, %178 : vector<2x32xf32>
    %c5 = arith.constant 5 : index
    %c0_47 = arith.constant 0 : index
    %c0_48 = arith.constant 0 : index
    %180 = vector.load %arg9[%c5, %c0_47, %c0_48] : memref<8x2x32xf32, #tpu.memory_space<vmem>>, vector<1x2x32xf32>
    %181 = vector.shape_cast %180 : vector<1x2x32xf32> to vector<2x32xf32>
    %182 = vector.shape_cast %179 : vector<2x32xf32> to vector<1x2x32xf32>
    tpu.vector_store %arg9[%c5, %c0_47, %c0_48], %182 {strides = array<i32>} : memref<8x2x32xf32, #tpu.memory_space<vmem>>, vector<1x2x32xf32>,
    %183 = vector.extract_strided_slice %13 {offsets = [6, 0, 0], sizes = [1, 2, 96], strides = [1, 1, 1]} : vector<8x2x96xf32> to vector<1x2x96xf32>
    %184 = vector.shape_cast %183 : vector<1x2x96xf32> to vector<2x96xf32>
    %cst_49 = arith.constant dense<0.000000e+00> : vector<2x96xf32>
    %185 = tpu.matmul %179, %1, %cst_49 {dimension_numbers = #tpu.dot_dimension_numbers<[1], [0], [0], [1], [0, 0, 1, 1], [], []>} : vector<2x32xf32>, vector<32x96xf32>, vector<2x96xf32> -> vector<2x96xf32>
    %186 = vector.extract_strided_slice %184 {offsets = [0, 0], sizes = [2, 64], strides = [1, 1]} : vector<2x96xf32> to vector<2x64xf32>
    %187 = vector.extract_strided_slice %185 {offsets = [0, 0], sizes = [2, 64], strides = [1, 1]} : vector<2x96xf32> to vector<2x64xf32>
    %188 = arith.addf %186, %187 : vector<2x64xf32>
    %189 = arith.negf %188 : vector<2x64xf32>
    %190 = math.exp %189 : vector<2x64xf32>
    %cst_50 = arith.constant 1.000000e+00 : f32
    %191 = vector.broadcast %cst_50 : f32 to vector<2x64xf32>
    %192 = arith.addf %191, %190 : vector<2x64xf32>
    %193 = arith.divf %191, %192 : vector<2x64xf32>
    %194 = vector.extract_strided_slice %193 {offsets = [0, 0], sizes = [2, 32], strides = [1, 1]} : vector<2x64xf32> to vector<2x32xf32>
    %195 = vector.extract_strided_slice %193 {offsets = [0, 32], sizes = [2, 32], strides = [1, 1]} : vector<2x64xf32> to vector<2x32xf32>
    %196 = vector.extract_strided_slice %184 {offsets = [0, 64], sizes = [2, 32], strides = [1, 1]} : vector<2x96xf32> to vector<2x32xf32>
    %197 = vector.extract_strided_slice %185 {offsets = [0, 64], sizes = [2, 32], strides = [1, 1]} : vector<2x96xf32> to vector<2x32xf32>
    %198 = vector.broadcast %3 : vector<1x32xf32> to vector<2x32xf32>
    %199 = arith.addf %197, %198 : vector<2x32xf32>
    %200 = arith.mulf %194, %199 : vector<2x32xf32>
    %201 = arith.addf %196, %200 : vector<2x32xf32>
    %202 = math.tanh %201 : vector<2x32xf32>
    %cst_51 = arith.constant 1.000000e+00 : f32
    %203 = vector.broadcast %cst_51 : f32 to vector<2x32xf32>
    %204 = arith.subf %203, %195 : vector<2x32xf32>
    %205 = arith.mulf %204, %202 : vector<2x32xf32>
    %206 = arith.mulf %195, %179 : vector<2x32xf32>
    %207 = arith.addf %205, %206 : vector<2x32xf32>
    %c6 = arith.constant 6 : index
    %c0_52 = arith.constant 0 : index
    %c0_53 = arith.constant 0 : index
    %208 = vector.load %arg9[%c6, %c0_52, %c0_53] : memref<8x2x32xf32, #tpu.memory_space<vmem>>, vector<1x2x32xf32>
    %209 = vector.shape_cast %208 : vector<1x2x32xf32> to vector<2x32xf32>
    %210 = vector.shape_cast %207 : vector<2x32xf32> to vector<1x2x32xf32>
    tpu.vector_store %arg9[%c6, %c0_52, %c0_53], %210 {strides = array<i32>} : memref<8x2x32xf32, #tpu.memory_space<vmem>>, vector<1x2x32xf32>,
    %211 = vector.extract_strided_slice %13 {offsets = [7, 0, 0], sizes = [1, 2, 96], strides = [1, 1, 1]} : vector<8x2x96xf32> to vector<1x2x96xf32>
    %212 = vector.shape_cast %211 : vector<1x2x96xf32> to vector<2x96xf32>
    %cst_54 = arith.constant dense<0.000000e+00> : vector<2x96xf32>
    %213 = tpu.matmul %207, %1, %cst_54 {dimension_numbers = #tpu.dot_dimension_numbers<[1], [0], [0], [1], [0, 0, 1, 1], [], []>} : vector<2x32xf32>, vector<32x96xf32>, vector<2x96xf32> -> vector<2x96xf32>
    %214 = vector.extract_strided_slice %212 {offsets = [0, 0], sizes = [2, 64], strides = [1, 1]} : vector<2x96xf32> to vector<2x64xf32>
    %215 = vector.extract_strided_slice %213 {offsets = [0, 0], sizes = [2, 64], strides = [1, 1]} : vector<2x96xf32> to vector<2x64xf32>
    %216 = arith.addf %214, %215 : vector<2x64xf32>
    %217 = arith.negf %216 : vector<2x64xf32>
    %218 = math.exp %217 : vector<2x64xf32>
    %cst_55 = arith.constant 1.000000e+00 : f32
    %219 = vector.broadcast %cst_55 : f32 to vector<2x64xf32>
    %220 = arith.addf %219, %218 : vector<2x64xf32>
    %221 = arith.divf %219, %220 : vector<2x64xf32>
    %222 = vector.extract_strided_slice %221 {offsets = [0, 0], sizes = [2, 32], strides = [1, 1]} : vector<2x64xf32> to vector<2x32xf32>
    %223 = vector.extract_strided_slice %221 {offsets = [0, 32], sizes = [2, 32], strides = [1, 1]} : vector<2x64xf32> to vector<2x32xf32>
    %224 = vector.extract_strided_slice %212 {offsets = [0, 64], sizes = [2, 32], strides = [1, 1]} : vector<2x96xf32> to vector<2x32xf32>
    %225 = vector.extract_strided_slice %213 {offsets = [0, 64], sizes = [2, 32], strides = [1, 1]} : vector<2x96xf32> to vector<2x32xf32>
    %226 = vector.broadcast %3 : vector<1x32xf32> to vector<2x32xf32>
    %227 = arith.addf %225, %226 : vector<2x32xf32>
    %228 = arith.mulf %222, %227 : vector<2x32xf32>
    %229 = arith.addf %224, %228 : vector<2x32xf32>
    %230 = math.tanh %229 : vector<2x32xf32>
    %cst_56 = arith.constant 1.000000e+00 : f32
    %231 = vector.broadcast %cst_56 : f32 to vector<2x32xf32>
    %232 = arith.subf %231, %223 : vector<2x32xf32>
    %233 = arith.mulf %232, %230 : vector<2x32xf32>
    %234 = arith.mulf %223, %207 : vector<2x32xf32>
    %235 = arith.addf %233, %234 : vector<2x32xf32>
    %c7 = arith.constant 7 : index
    %c0_57 = arith.constant 0 : index
    %c0_58 = arith.constant 0 : index
    %236 = vector.load %arg9[%c7, %c0_57, %c0_58] : memref<8x2x32xf32, #tpu.memory_space<vmem>>, vector<1x2x32xf32>
    %237 = vector.shape_cast %236 : vector<1x2x32xf32> to vector<2x32xf32>
    %238 = vector.shape_cast %235 : vector<2x32xf32> to vector<1x2x32xf32>
    tpu.vector_store %arg9[%c7, %c0_57, %c0_58], %238 {strides = array<i32>} : memref<8x2x32xf32, #tpu.memory_space<vmem>>, vector<1x2x32xf32>,
    %c0_59 = arith.constant 0 : index
    %c0_60 = arith.constant 0 : index
    %c0_61 = arith.constant 0 : index
    %239 = vector.load %arg9[%c0_59, %c0_60, %c0_61] : memref<8x2x32xf32, #tpu.memory_space<vmem>>, vector<8x2x32xf32>
    %240 = vector.shape_cast %239 : vector<8x2x32xf32> to vector<16x32xf32>
    %cst_62 = arith.constant dense<0.000000e+00> : vector<16x8xf32>
    %241 = tpu.matmul %240, %4, %cst_62 {dimension_numbers = #tpu.dot_dimension_numbers<[1], [0], [0], [1], [0, 0, 1, 1], [], []>} : vector<16x32xf32>, vector<32x8xf32>, vector<16x8xf32> -> vector<16x8xf32>
    %242 = vector.broadcast %5 : vector<1x8xf32> to vector<16x8xf32>
    %243 = arith.addf %241, %242 : vector<16x8xf32>
    %c0_63 = arith.constant 0 : index
    %c0_64 = arith.constant 0 : index
    %244 = vector.load %arg1[%c0_63, %c0_64] : memref<16x16xf32, #tpu.memory_space<vmem>>, vector<16x16xf32>
    %cst_65 = arith.constant dense<0.000000e+00> : vector<16x8xf32>
    %245 = tpu.matmul %244, %243, %cst_65 {dimension_numbers = #tpu.dot_dimension_numbers<[1], [0], [0], [1], [0, 0, 1, 1], [], []>} : vector<16x16xf32>, vector<16x8xf32>, vector<16x8xf32> -> vector<16x8xf32>
    %c0_66 = arith.constant 0 : index
    %c0_67 = arith.constant 0 : index
    %246 = vector.load %arg10[%c0_66, %c0_67] : memref<16x8xf32, #tpu.memory_space<vmem>>, vector<16x8xf32>
    tpu.vector_store %arg10[%c0_66, %c0_67], %245 {strides = array<i32>} : memref<16x8xf32, #tpu.memory_space<vmem>>, vector<16x8xf32>,
    return
  }
}

</mosaic_0001>

<llo_original>
// kernel: tpu_custom_call.1
$region0: #{tpu_custom_call.1}
  #allocation0 [shape = 'u32[]', space=smem, size = 0x4, offset = 0x4, fixed_abs, tag = 'smem constant byte address 0x4 - core index']
  #allocation1 [shape = 'u32[144,128]{1,0:T(1,128)}', space=vmem, size = 0x12000, scoped, tag = 'internal scratch']
  %s0 = inlined_call_operand.vmem [shape: f32[16,16], index: 0, kind: input, shape index: {}]
  %s1 = inlined_call_operand.hbm [shape: f32[16,16], index: 1, kind: input, shape index: {}]
  %s2 = inlined_call_operand.hbm [shape: f32[2,8,32], index: 2, kind: input, shape index: {}]
  %s3 = inlined_call_operand.vmem [shape: f32[32,96], index: 3, kind: input, shape index: {}]
  %s4 = inlined_call_operand.hbm [shape: f32[32,96], index: 4, kind: input, shape index: {}]
  %s5 = inlined_call_operand.vmem [shape: f32[1,96], index: 5, kind: input, shape index: {}]
  %s6 = inlined_call_operand.vmem [shape: f32[1,32], index: 6, kind: input, shape index: {}]
  %s7 = inlined_call_operand.vmem [shape: f32[32,8], index: 7, kind: input, shape index: {}]
  %s8 = inlined_call_operand.vmem [shape: f32[1,8], index: 8, kind: input, shape index: {}]
  %s9 = inlined_call_operand.hbm [shape: f32[8,2,32], index: 9, kind: output, shape index: {0}]
  %s10 = inlined_call_operand.vmem [shape: f32[16,8], index: 10, kind: output, shape index: {1}]
  %11 = xla_tuple %s9, %s10
  %s12 = sld [smem:[#allocation0]]
  $region66: #{tpu_custom_call.1} parent=0
    _
  %s14 = ssub.s32 1, %s12
  %s15 = scalar_select 0, %s14, %s12
  $region1: #{tpu_custom_call.1} parent=0
    #allocation2 [shape = 'u8[8192]{0}', space=vmem, size = 0x2000, scoped, tag = 'input window, operand 1, single buffered']
    #allocation3 [shape = 's32[1]{0}', space=sflag, size = 0x4, scoped, tag = 'scoped memory for tpu_custom_call.1']
    #allocation4 [shape = 's32[1]{0}', space=sflag, size = 0x4, scoped, tag = 'scoped memory for tpu_custom_call.1']
    #allocation5 [shape = 'u8[8192]{0}', space=vmem, size = 0x2000, scoped, tag = 'input window, operand 2, single buffered']
    #allocation6 [shape = 's32[1]{0}', space=sflag, size = 0x4, scoped, tag = 'scoped memory for tpu_custom_call.1']
    #allocation7 [shape = 'u8[16384]{0}', space=vmem, size = 0x4000, scoped, tag = 'input window, operand 4, single buffered']
    #allocation8 [shape = 'u8[8192]{0}', space=vmem, size = 0x2000, scoped, tag = 'output window, operand 0, single buffered']
    %16 = vsyncpa [#allocation3], 0
    %17 = vsyncpa [#allocation6], 0
    %18 = vsyncpa [#allocation4], 0
    // Predicated region
    $region2: #{tpu_custom_call.1} parent=1 // pred_check
      _
    $region3: #{tpu_custom_call.1} parent=1 // pred_check_branch
      %20 = sbr.rel (0) target = $region5
    $region4: #{tpu_custom_call.1} parent=1 // pred_region
      _
    $region5: #{tpu_custom_call.1} parent=1 // pred_fallthru
      _
    // Predicated region
    $region6: #{tpu_custom_call.1} parent=1 // pred_check
      _
    $region7: #{tpu_custom_call.1} parent=1 // pred_check_branch
      %22 = sbr.rel (0) target = $region9
    $region8: #{tpu_custom_call.1} parent=1 // pred_region
      %s24 = ssub.s32 256, 256
      %25 = vsyncadd [#allocation3], %s24
      %s26 = sshll.u32 [#allocation2], 4
      %s27 = int_to_ptr.vmem [resolvable:$true] %s26
      %32 = dma.hbm_to_vmem [thread:$0]  %s1, 256, %s27, [#allocation3], 128, 128, 8
    $region9: #{tpu_custom_call.1} parent=1 // pred_fallthru
      _
    // Predicated region
    $region10: #{tpu_custom_call.1} parent=1 // pred_check
      _
    $region11: #{tpu_custom_call.1} parent=1 // pred_check_branch
      %34 = sbr.rel (0) target = $region13
    $region12: #{tpu_custom_call.1} parent=1 // pred_region
      %s36 = ssub.s32 256, 256
      %37 = vsyncadd [#allocation6], %s36
      %s38 = sshll.u32 [#allocation5], 4
      %s39 = int_to_ptr.vmem [resolvable:$true] %s38
      %44 = dma.hbm_to_vmem [thread:$0]  %s2, 256, %s39, [#allocation6], 128, 128, 8
    $region13: #{tpu_custom_call.1} parent=1 // pred_fallthru
      _
    // Predicated region
    $region14: #{tpu_custom_call.1} parent=1 // pred_check
      _
    $region15: #{tpu_custom_call.1} parent=1 // pred_check_branch
      %46 = sbr.rel (0) target = $region17
    $region16: #{tpu_custom_call.1} parent=1 // pred_region
      _
    $region17: #{tpu_custom_call.1} parent=1 // pred_fallthru
      _
    // Predicated region
    $region18: #{tpu_custom_call.1} parent=1 // pred_check
      _
    $region19: #{tpu_custom_call.1} parent=1 // pred_check_branch
      %48 = sbr.rel (0) target = $region21
    $region20: #{tpu_custom_call.1} parent=1 // pred_region
      %s50 = ssub.s32 512, 512
      %51 = vsyncadd [#allocation6], %s50
      %s52 = sshll.u32 [#allocation7], 4
      %s53 = int_to_ptr.vmem [resolvable:$true] %s52
      %58 = dma.hbm_to_vmem [thread:$0]  %s4, 512, %s53, [#allocation6], 128, 128, 8
    $region21: #{tpu_custom_call.1} parent=1 // pred_fallthru
      _
    // Predicated region
    $region22: #{tpu_custom_call.1} parent=1 // pred_check
      _
    $region23: #{tpu_custom_call.1} parent=1 // pred_check_branch
      %60 = sbr.rel (0) target = $region25
    $region24: #{tpu_custom_call.1} parent=1 // pred_region
      _
    $region25: #{tpu_custom_call.1} parent=1 // pred_fallthru
      _
    // Predicated region
    $region26: #{tpu_custom_call.1} parent=1 // pred_check
      _
    $region27: #{tpu_custom_call.1} parent=1 // pred_check_branch
      %62 = sbr.rel (0) target = $region29
    $region28: #{tpu_custom_call.1} parent=1 // pred_region
      _
    $region29: #{tpu_custom_call.1} parent=1 // pred_fallthru
      _
    // Predicated region
    $region30: #{tpu_custom_call.1} parent=1 // pred_check
      _
    $region31: #{tpu_custom_call.1} parent=1 // pred_check_branch
      %64 = sbr.rel (0) target = $region33
    $region32: #{tpu_custom_call.1} parent=1 // pred_region
      _
    $region33: #{tpu_custom_call.1} parent=1 // pred_fallthru
      _
    // Predicated region
    $region34: #{tpu_custom_call.1} parent=1 // pred_check
      _
    $region35: #{tpu_custom_call.1} parent=1 // pred_check_branch
      %66 = sbr.rel (0) target = $region37
    $region36: #{tpu_custom_call.1} parent=1 // pred_region
      _
    $region37: #{tpu_custom_call.1} parent=1 // pred_fallthru
      _
    // Predicated region
    $region38: #{tpu_custom_call.1} parent=1 // pred_check
      _
    $region39: #{tpu_custom_call.1} parent=1 // pred_check_branch
      %68 = sbr.rel (0) target = $region41
    $region40: #{tpu_custom_call.1} parent=1 // pred_region
      %69 = dma.done [#allocation3], 256
    $region41: #{tpu_custom_call.1} parent=1 // pred_fallthru
      _
    // Predicated region
    $region42: #{tpu_custom_call.1} parent=1 // pred_check
      _
    $region43: #{tpu_custom_call.1} parent=1 // pred_check_branch
      %71 = sbr.rel (0) target = $region45
    $region44: #{tpu_custom_call.1} parent=1 // pred_region
      %72 = dma.done [#allocation6], 256
    $region45: #{tpu_custom_call.1} parent=1 // pred_fallthru
      _
    // Predicated region
    $region46: #{tpu_custom_call.1} parent=1 // pred_check
      _
    $region47: #{tpu_custom_call.1} parent=1 // pred_check_branch
      %74 = sbr.rel (0) target = $region49
    $region48: #{tpu_custom_call.1} parent=1 // pred_region
      %75 = dma.done [#allocation6], 512
    $region49: #{tpu_custom_call.1} parent=1 // pred_fallthru
      _
    %v76 = vld [vmem:[%s3] sm:$0xff]
    %v77 = vld [vmem:[%s3 + $0x8] sm:$0xff]
    %v78 = vld [vmem:[%s3 + $0x10] sm:$0xff]
    %v79 = vld [vmem:[%s3 + $0x18] sm:$0xff]
    %v80 = vld [vmem:[#allocation7] sm:$0xff]
    %v81 = vld [vmem:[#allocation7 + $0x8] sm:$0xff]
    %v82 = vld [vmem:[#allocation7 + $0x10] sm:$0xff]
    %v83 = vld [vmem:[#allocation7 + $0x18] sm:$0xff]
    %v84 = vld [vmem:[%s5] sm:$0x1]
    %v85 = vld [vmem:[%s6] sm:$0x1]
    %v86 = vld [vmem:[%s7] sm:$0xff]
    %v87 = vld [vmem:[%s7 + $0x8] sm:$0xff]
    %v88 = vld [vmem:[%s7 + $0x10] sm:$0xff]
    %v89 = vld [vmem:[%s7 + $0x18] sm:$0xff]
    %v90 = vld [vmem:[%s8] sm:$0x1]
    %v91 = vld [vmem:[#allocation5] sm:$0xff]
    %v92 = vld [vmem:[#allocation5 + $0x8] sm:$0xff]
    %v93 = vld [vmem:[%s0] sm:$0xff]
    %v94 = vld [vmem:[%s0 + $0x8] sm:$0xff]
    %vm95 = vcmask 130048
    %v97 = vsel %vm95, %v93, 0
    %v100 = vsel %vm95, %v94, 0
    %102 = vmatprep.subr.mxu0 0.0
    %103 = vmatpush1.msra.mxu0 %v91
    %104 = vmatprep.subr.mxu0 0.0
    %105 = vmatpush1.msra.mxu0 %v92
    %106 = vmatprep.subr.mxu0 0.0
    %107 = vmatpush1.msra.mxu0 0.0
    %108 = vmatprep.subr.mxu0 0.0
    %109 = vmatpush1.msra.mxu0 0.0
    %110 = vmatprep.subr.mxu0 0.0
    %111 = vmatpush1.msra.mxu0 0.0
    %112 = vmatprep.subr.mxu0 0.0
    %113 = vmatpush1.msra.mxu0 0.0
    %114 = vmatprep.subr.mxu0 0.0
    %115 = vmatpush1.msra.mxu0 0.0
    %116 = vmatprep.subr.mxu0 0.0
    %117 = vmatpush1.msra.mxu0 0.0
    %118 = vmatprep.subr.mxu0 0.0
    %119 = vmatpush1.msra.mxu0 0.0
    %120 = vmatprep.subr.mxu0 0.0
    %121 = vmatpush1.msra.mxu0 0.0
    %122 = vmatprep.subr.mxu0 0.0
    %123 = vmatpush1.msra.mxu0 0.0
    %124 = vmatprep.subr.mxu0 0.0
    %125 = vmatpush1.msra.mxu0 0.0
    %126 = vmatprep.subr.mxu0 0.0
    %127 = vmatpush1.msra.mxu0 0.0
    %128 = vmatprep.subr.mxu0 0.0
    %129 = vmatpush1.msra.mxu0 0.0
    %130 = vmatprep.subr.mxu0 0.0
    %131 = vmatpush1.msra.mxu0 0.0
    %132 = vmatprep.subr.mxu0 0.0
    %133 = vmatpush1.msra.mxu0 0.0
    %134 = vmatprep.subr.mxu0 0.0
    %135 = vmatpush1.msra.mxu0 0.0
    %136 = vmatprep.subr.mxu0 0.0
    %137 = vmatpush1.msra.mxu0 0.0
    %138 = vmatprep.subr.mxu0 0.0
    %139 = vmatpush1.msra.mxu0 0.0
    %140 = vmatprep.subr.mxu0 0.0
    %141 = vmatpush1.msra.mxu0 0.0
    %142 = vmatprep.subr.mxu0 0.0
    %143 = vmatpush1.msra.mxu0 0.0
    %144 = vmatprep.subr.mxu0 0.0
    %145 = vmatpush1.msra.mxu0 0.0
    %146 = vmatprep.subr.mxu0 0.0
    %147 = vmatpush1.msra.mxu0 0.0
    %148 = vmatprep.subr.mxu0 0.0
    %149 = vmatpush1.msra.mxu0 0.0
    %150 = vmatprep.subr.mxu0 0.0
    %151 = vmatpush1.msra.mxu0 0.0
    %152 = vmatprep.subr.mxu0 0.0
    %153 = vmatpush1.msra.mxu0 0.0
    %154 = vmatprep.subr.mxu0 0.0
    %155 = vmatpush1.msra.mxu0 0.0
    %156 = vmatprep.subr.mxu0 0.0
    %157 = vmatpush1.msra.mxu0 0.0
    %158 = vmatprep.subr.mxu0 0.0
    %159 = vmatpush1.msra.mxu0 0.0
    %160 = vmatprep.subr.mxu0 0.0
    %161 = vmatpush1.msra.mxu0 0.0
    %162 = vmatprep.subr.mxu0 0.0
    %163 = vmatpush1.msra.mxu0 0.0
    %164 = vmatprep.subr.mxu0 0.0
    %165 = vmatpush1.msra.mxu0 0.0
    %166 = vmatprep.mubr.f32.mxu0 0.0
    %167 = vmatmul.mubr.f32.gmra.mrb[0].mxu0 %v97
    %v168 = vpop.f32.mrb[0].mxu0
    %v169 = vadd.f32 0.0, %v168
    %v170 = vpop.f32.mrb[0].mxu0
    %171 = vmatprep.mubr.f32.mxu0 0.0
    %172 = vmatmul.mubr.f32.gmra.mrb[0].mxu0 %v100
    %v173 = vpop.f32.mrb[0].mxu0
    %v174 = vadd.f32 0.0, %v173
    %v175 = vpop.f32.mrb[0].mxu0
    %176 = vdwg.mxu0
    %v178 = vlaneseq
    %v179 = vshrl.u32 %v178, 7
    %v180 = vsub.s32 0, %v179
    %v181 = vrot.slane %v84, %v180
    %vm183 = vcmask 261120
    %v185 = vsel %vm183, %v169, 0
    %v188 = vsel %vm183, %v174, 0
    %190 = vmatprep.subr.mxu0 0.0
    %191 = vmatpush1.msra.mxu0 %v76
    %192 = vmatprep.subr.mxu0 0.0
    %193 = vmatpush1.msra.mxu0 %v77
    %194 = vmatprep.subr.mxu0 0.0
    %195 = vmatpush1.msra.mxu0 %v78
    %196 = vmatprep.subr.mxu0 0.0
    %197 = vmatpush1.msra.mxu0 %v79
    %198 = vmatprep.subr.mxu0 0.0
    %199 = vmatpush1.msra.mxu0 0.0
    %200 = vmatprep.subr.mxu0 0.0
    %201 = vmatpush1.msra.mxu0 0.0
    %202 = vmatprep.subr.mxu0 0.0
    %203 = vmatpush1.msra.mxu0 0.0
    %204 = vmatprep.subr.mxu0 0.0
    %205 = vmatpush1.msra.mxu0 0.0
    %206 = vmatprep.subr.mxu0 0.0
    %207 = vmatpush1.msra.mxu0 0.0
    %208 = vmatprep.subr.mxu0 0.0
    %209 = vmatpush1.msra.mxu0 0.0
    %210 = vmatprep.subr.mxu0 0.0
    %211 = vmatpush1.msra.mxu0 0.0
    %212 = vmatprep.subr.mxu0 0.0
    %213 = vmatpush1.msra.mxu0 0.0
    %214 = vmatprep.subr.mxu0 0.0
    %215 = vmatpush1.msra.mxu0 0.0
    %216 = vmatprep.subr.mxu0 0.0
    %217 = vmatpush1.msra.mxu0 0.0
    %218 = vmatprep.subr.mxu0 0.0
    %219 = vmatpush1.msra.mxu0 0.0
    %220 = vmatprep.subr.mxu0 0.0
    %221 = vmatpush1.msra.mxu0 0.0
    %222 = vmatprep.subr.mxu0 0.0
    %223 = vmatpush1.msra.mxu0 0.0
    %224 = vmatprep.subr.mxu0 0.0
    %225 = vmatpush1.msra.mxu0 0.0
    %226 = vmatprep.subr.mxu0 0.0
    %227 = vmatpush1.msra.mxu0 0.0
    %228 = vmatprep.subr.mxu0 0.0
    %229 = vmatpush1.msra.mxu0 0.0
    %230 = vmatprep.subr.mxu0 0.0
    %231 = vmatpush1.msra.mxu0 0.0
    %232 = vmatprep.subr.mxu0 0.0
    %233 = vmatpush1.msra.mxu0 0.0
    %234 = vmatprep.subr.mxu0 0.0
    %235 = vmatpush1.msra.mxu0 0.0
    %236 = vmatprep.subr.mxu0 0.0
    %237 = vmatpush1.msra.mxu0 0.0
    %238 = vmatprep.subr.mxu0 0.0
    %239 = vmatpush1.msra.mxu0 0.0
    %240 = vmatprep.subr.mxu0 0.0
    %241 = vmatpush1.msra.mxu0 0.0
    %242 = vmatprep.subr.mxu0 0.0
    %243 = vmatpush1.msra.mxu0 0.0
    %244 = vmatprep.subr.mxu0 0.0
    %245 = vmatpush1.msra.mxu0 0.0
    %246 = vmatprep.subr.mxu0 0.0
    %247 = vmatpush1.msra.mxu0 0.0
    %248 = vmatprep.subr.mxu0 0.0
    %249 = vmatpush1.msra.mxu0 0.0
    %250 = vmatprep.subr.mxu0 0.0
    %251 = vmatpush1.msra.mxu0 0.0
    %252 = vmatprep.subr.mxu0 0.0
    %253 = vmatpush1.msra.mxu0 0.0
    %254 = vmatprep.mubr.f32.mxu0 0.0
    %255 = vmatmul.mubr.f32.gmra.mrb[0].mxu0 %v185
    %v256 = vpop.f32.mrb[0].mxu0
    %v257 = vadd.f32 %v181, %v256
    %v258 = vpop.f32.mrb[0].mxu0
    %259 = vmatprep.mubr.f32.mxu0 0.0
    %260 = vmatmul.mubr.f32.gmra.mrb[0].mxu0 %v188
    %v261 = vpop.f32.mrb[0].mxu0
    %v262 = vadd.f32 %v181, %v261
    %v263 = vpop.f32.mrb[0].mxu0
    %264 = vdwg.mxu0
    %v267 = vcombine.high %v257, %v257
    %v269 = vunpack.c.l.s4 1983009808
    %v270 = vunpack.c.0.s8 %v269
    %v271 = vlaneseq
    %v272 = vshrl.u32 %v271, 7
    %v273 = vsub.s32 %v270, %v272
    %v274 = vrot.slane %v257, %v273
    %v276 = vunpack.c.l.s4 1983009808
    %v277 = vunpack.c.0.s8 %v276
    %v278 = vlaneseq
    %v279 = vshrl.u32 %v278, 7
    %v280 = vsub.s32 %v277, %v279
    %v281 = vrot.slane %v267, %v280
    %v282 = vcombine.high %v274, %v274
    %v283 = vcombine.high %v281, %v281
    %v284 = vcombine.high %v262, %v262
    %v286 = vunpack.c.l.s4 1983009808
    %v287 = vunpack.c.0.s8 %v286
    %v288 = vlaneseq
    %v289 = vshrl.u32 %v288, 7
    %v290 = vsub.s32 %v287, %v289
    %v291 = vrot.slane %v262, %v290
    %v293 = vunpack.c.l.s4 1983009808
    %v294 = vunpack.c.0.s8 %v293
    %v295 = vlaneseq
    %v296 = vshrl.u32 %v295, 7
    %v297 = vsub.s32 %v294, %v296
    %v298 = vrot.slane %v284, %v297
    %v299 = vcombine.high %v291, %v291
    %v300 = vcombine.high %v298, %v298
    %v310 = vsel %vm183, 0.0, 0
    %312 = vmatprep.subr.mxu0 0.0
    %313 = vmatpush1.msra.mxu0 %v80
    %314 = vmatprep.subr.mxu0 0.0
    %315 = vmatpush1.msra.mxu0 %v81
    %316 = vmatprep.subr.mxu0 0.0
    %317 = vmatpush1.msra.mxu0 %v82
    %318 = vmatprep.subr.mxu0 0.0
    %319 = vmatpush1.msra.mxu0 %v83
    %320 = vmatprep.subr.mxu0 0.0
    %321 = vmatpush1.msra.mxu0 0.0
    %322 = vmatprep.subr.mxu0 0.0
    %323 = vmatpush1.msra.mxu0 0.0
    %324 = vmatprep.subr.mxu0 0.0
    %325 = vmatpush1.msra.mxu0 0.0
    %326 = vmatprep.subr.mxu0 0.0
    %327 = vmatpush1.msra.mxu0 0.0
    %328 = vmatprep.subr.mxu0 0.0
    %329 = vmatpush1.msra.mxu0 0.0
    %330 = vmatprep.subr.mxu0 0.0
    %331 = vmatpush1.msra.mxu0 0.0
    %332 = vmatprep.subr.mxu0 0.0
    %333 = vmatpush1.msra.mxu0 0.0
    %334 = vmatprep.subr.mxu0 0.0
    %335 = vmatpush1.msra.mxu0 0.0
    %336 = vmatprep.subr.mxu0 0.0
    %337 = vmatpush1.msra.mxu0 0.0
    %338 = vmatprep.subr.mxu0 0.0
    %339 = vmatpush1.msra.mxu0 0.0
    %340 = vmatprep.subr.mxu0 0.0
    %341 = vmatpush1.msra.mxu0 0.0
    %342 = vmatprep.subr.mxu0 0.0
    %343 = vmatpush1.msra.mxu0 0.0
    %344 = vmatprep.subr.mxu0 0.0
    %345 = vmatpush1.msra.mxu0 0.0
    %346 = vmatprep.subr.mxu0 0.0
    %347 = vmatpush1.msra.mxu0 0.0
    %348 = vmatprep.subr.mxu0 0.0
    %349 = vmatpush1.msra.mxu0 0.0
    %350 = vmatprep.subr.mxu0 0.0
    %351 = vmatpush1.msra.mxu0 0.0
    %352 = vmatprep.subr.mxu0 0.0
    %353 = vmatpush1.msra.mxu0 0.0
    %354 = vmatprep.subr.mxu0 0.0
    %355 = vmatpush1.msra.mxu0 0.0
    %356 = vmatprep.subr.mxu0 0.0
    %357 = vmatpush1.msra.mxu0 0.0
    %358 = vmatprep.subr.mxu0 0.0
    %359 = vmatpush1.msra.mxu0 0.0
    %360 = vmatprep.subr.mxu0 0.0
    %361 = vmatpush1.msra.mxu0 0.0
    %362 = vmatprep.subr.mxu0 0.0
    %363 = vmatpush1.msra.mxu0 0.0
    %364 = vmatprep.subr.mxu0 0.0
    %365 = vmatpush1.msra.mxu0 0.0
    %366 = vmatprep.subr.mxu0 0.0
    %367 = vmatpush1.msra.mxu0 0.0
    %368 = vmatprep.subr.mxu0 0.0
    %369 = vmatpush1.msra.mxu0 0.0
    %370 = vmatprep.subr.mxu0 0.0
    %371 = vmatpush1.msra.mxu0 0.0
    %372 = vmatprep.subr.mxu0 0.0
    %373 = vmatpush1.msra.mxu0 0.0
    %374 = vmatprep.subr.mxu0 0.0
    %375 = vmatpush1.msra.mxu0 0.0
    %376 = vmatprep.mubr.f32.mxu0 0.0
    %377 = vmatmul.mubr.f32.gmra.mrb[0].mxu0 %v310
    %v378 = vpop.f32.mrb[0].mxu0
    %v379 = vadd.f32 0.0, %v378
    %v380 = vpop.f32.mrb[0].mxu0
    %381 = vdwg.mxu0
    %v382 = vadd.f32 %v274, %v379
    %v383 = vxor.u32 %v382, 2147483648
    %v384 = vmul.f32 %v383, 1.442695
    %v385 = vpow.pop %v384
    %v386 = vadd.f32 %v385, 1.0
    %v387 = vrcp.pop %v386
    %v388 = vmul.f32 1.0, %v387
    %v390 = vlaneseq
    %v391 = vshrl.u32 %v390, 7
    %v392 = vsub.s32 0, %v391
    %v393 = vrot.slane %v85, %v392
    %394 = vrot.lane.b32.xlu0 %v393, 64
    %v395 = vpop.permute.xlu0 %394
    %v397 = vadd.f32 %v379, %v395
    %v400 = vunpack.c.l.s4 1983009808
    %v401 = vunpack.c.0.s8 %v400
    %v402 = vlaneseq
    %v403 = vshrl.u32 %v402, 7
    %v404 = vsub.s32 %v401, %v403
    %v405 = vrot.slane %v397, %v404
    %406 = vrot.lane.b32.xlu0 %v405, 64
    %v407 = vpop.permute.xlu0 %406
    %v409 = vmul.f32 %v388, %v407
    %411 = vrot.lane.b32.xlu0 %v409, 64
    %v412 = vpop.permute.xlu0 %411
    %v414 = vadd.f32 %v274, %v412
    %v415 = vtanh.pop %v414
    %v416 = vsub.f32 1.0, %v388
    %418 = vrot.lane.b32.xlu0 %v415, 96
    %v419 = vpop.permute.xlu0 %418
    %v421 = vmul.f32 %v416, %v419
    %v422 = vmul.f32 %v388, 0.0
    %v423 = vadd.f32 %v421, %v422
    %v426 = vunpack.c.l.s4 1983009808
    %v427 = vunpack.c.0.s8 %v426
    %v428 = vlaneseq
    %v429 = vshrl.u32 %v428, 7
    %v430 = vsub.s32 %v427, %v429
    %v431 = vrot.slane %v423, %v430
    %432 = vrot.lane.b32.xlu0 %v431, 96
    %v433 = vpop.permute.xlu0 %432
    %vm435 = vcmask 254976
    %436 = vst.msk [vmem:[#allocation8] sm:$0x3] %vm435, %v433
    %v437 = vsel %vm183, %v433, 0
    %439 = vmatprep.subr.mxu0 0.0
    %440 = vmatpush1.msra.mxu0 %v80
    %441 = vmatprep.subr.mxu0 0.0
    %442 = vmatpush1.msra.mxu0 %v81
    %443 = vmatprep.subr.mxu0 0.0
    %444 = vmatpush1.msra.mxu0 %v82
    %445 = vmatprep.subr.mxu0 0.0
    %446 = vmatpush1.msra.mxu0 %v83
    %447 = vmatprep.subr.mxu0 0.0
    %448 = vmatpush1.msra.mxu0 0.0
    %449 = vmatprep.subr.mxu0 0.0
    %450 = vmatpush1.msra.mxu0 0.0
    %451 = vmatprep.subr.mxu0 0.0
    %452 = vmatpush1.msra.mxu0 0.0
    %453 = vmatprep.subr.mxu0 0.0
    %454 = vmatpush1.msra.mxu0 0.0
    %455 = vmatprep.subr.mxu0 0.0
    %456 = vmatpush1.msra.mxu0 0.0
    %457 = vmatprep.subr.mxu0 0.0
    %458 = vmatpush1.msra.mxu0 0.0
    %459 = vmatprep.subr.mxu0 0.0
    %460 = vmatpush1.msra.mxu0 0.0
    %461 = vmatprep.subr.mxu0 0.0
    %462 = vmatpush1.msra.mxu0 0.0
    %463 = vmatprep.subr.mxu0 0.0
    %464 = vmatpush1.msra.mxu0 0.0
    %465 = vmatprep.subr.mxu0 0.0
    %466 = vmatpush1.msra.mxu0 0.0
    %467 = vmatprep.subr.mxu0 0.0
    %468 = vmatpush1.msra.mxu0 0.0
    %469 = vmatprep.subr.mxu0 0.0
    %470 = vmatpush1.msra.mxu0 0.0
    %471 = vmatprep.subr.mxu0 0.0
    %472 = vmatpush1.msra.mxu0 0.0
    %473 = vmatprep.subr.mxu0 0.0
    %474 = vmatpush1.msra.mxu0 0.0
    %475 = vmatprep.subr.mxu0 0.0
    %476 = vmatpush1.msra.mxu0 0.0
    %477 = vmatprep.subr.mxu0 0.0
    %478 = vmatpush1.msra.mxu0 0.0
    %479 = vmatprep.subr.mxu0 0.0
    %480 = vmatpush1.msra.mxu0 0.0
    %481 = vmatprep.subr.mxu0 0.0
    %482 = vmatpush1.msra.mxu0 0.0
    %483 = vmatprep.subr.mxu0 0.0
    %484 = vmatpush1.msra.mxu0 0.0
    %485 = vmatprep.subr.mxu0 0.0
    %486 = vmatpush1.msra.mxu0 0.0
    %487 = vmatprep.subr.mxu0 0.0
    %488 = vmatpush1.msra.mxu0 0.0
    %489 = vmatprep.subr.mxu0 0.0
    %490 = vmatpush1.msra.mxu0 0.0
    %491 = vmatprep.subr.mxu0 0.0
    %492 = vmatpush1.msra.mxu0 0.0
    %493 = vmatprep.subr.mxu0 0.0
    %494 = vmatpush1.msra.mxu0 0.0
    %495 = vmatprep.subr.mxu0 0.0
    %496 = vmatpush1.msra.mxu0 0.0
    %497 = vmatprep.subr.mxu0 0.0
    %498 = vmatpush1.msra.mxu0 0.0
    %499 = vmatprep.subr.mxu0 0.0
    %500 = vmatpush1.msra.mxu0 0.0
    %501 = vmatprep.subr.mxu0 0.0
    %502 = vmatpush1.msra.mxu0 0.0
    %503 = vmatprep.mubr.f32.mxu0 0.0
    %504 = vmatmul.mubr.f32.gmra.mrb[0].mxu0 %v437
    %v505 = vpop.f32.mrb[0].mxu0
    %v506 = vadd.f32 0.0, %v505
    %v507 = vpop.f32.mrb[0].mxu0
    %508 = vdwg.mxu0
    %v509 = vadd.f32 %v282, %v506
    %v510 = vxor.u32 %v509, 2147483648
    %v511 = vmul.f32 %v510, 1.442695
    %v512 = vpow.pop %v511
    %v513 = vadd.f32 %v512, 1.0
    %v514 = vrcp.pop %v513
    %v515 = vmul.f32 1.0, %v514
    %v516 = vadd.f32 %v506, %v395
    %v519 = vunpack.c.l.s4 1983009808
    %v520 = vunpack.c.0.s8 %v519
    %v521 = vlaneseq
    %v522 = vshrl.u32 %v521, 7
    %v523 = vsub.s32 %v520, %v522
    %v524 = vrot.slane %v516, %v523
    %525 = vrot.lane.b32.xlu0 %v524, 64
    %v526 = vpop.permute.xlu0 %525
    %v528 = vmul.f32 %v515, %v526
    %530 = vrot.lane.b32.xlu0 %v528, 64
    %v531 = vpop.permute.xlu0 %530
    %v533 = vadd.f32 %v282, %v531
    %v534 = vtanh.pop %v533
    %v535 = vsub.f32 1.0, %v515
    %537 = vrot.lane.b32.xlu0 %v534, 96
    %v538 = vpop.permute.xlu0 %537
    %v540 = vmul.f32 %v535, %v538
    %v541 = vmul.f32 %v515, %v423
    %v542 = vadd.f32 %v540, %v541
    %v545 = vunpack.c.l.s4 1983009808
    %v546 = vunpack.c.0.s8 %v545
    %v547 = vlaneseq
    %v548 = vshrl.u32 %v547, 7
    %v549 = vsub.s32 %v546, %v548
    %v550 = vrot.slane %v542, %v549
    %551 = vrot.lane.b32.xlu0 %v550, 96
    %v552 = vpop.permute.xlu0 %551
    %s554 = scalar_lea.vmem [#allocation8], 2
    %555 = vst.msk [vmem:[%s554] sm:$0x3] %vm435, %v552
    %v556 = vsel %vm183, %v552, 0
    %558 = vmatprep.subr.mxu0 0.0
    %559 = vmatpush1.msra.mxu0 %v80
    %560 = vmatprep.subr.mxu0 0.0
    %561 = vmatpush1.msra.mxu0 %v81
    %562 = vmatprep.subr.mxu0 0.0
    %563 = vmatpush1.msra.mxu0 %v82
    %564 = vmatprep.subr.mxu0 0.0
    %565 = vmatpush1.msra.mxu0 %v83
    %566 = vmatprep.subr.mxu0 0.0
    %567 = vmatpush1.msra.mxu0 0.0
    %568 = vmatprep.subr.mxu0 0.0
    %569 = vmatpush1.msra.mxu0 0.0
    %570 = vmatprep.subr.mxu0 0.0
    %571 = vmatpush1.msra.mxu0 0.0
    %572 = vmatprep.subr.mxu0 0.0
    %573 = vmatpush1.msra.mxu0 0.0
    %574 = vmatprep.subr.mxu0 0.0
    %575 = vmatpush1.msra.mxu0 0.0
    %576 = vmatprep.subr.mxu0 0.0
    %577 = vmatpush1.msra.mxu0 0.0
    %578 = vmatprep.subr.mxu0 0.0
    %579 = vmatpush1.msra.mxu0 0.0
    %580 = vmatprep.subr.mxu0 0.0
    %581 = vmatpush1.msra.mxu0 0.0
    %582 = vmatprep.subr.mxu0 0.0
    %583 = vmatpush1.msra.mxu0 0.0
    %584 = vmatprep.subr.mxu0 0.0
    %585 = vmatpush1.msra.mxu0 0.0
    %586 = vmatprep.subr.mxu0 0.0
    %587 = vmatpush1.msra.mxu0 0.0
    %588 = vmatprep.subr.mxu0 0.0
    %589 = vmatpush1.msra.mxu0 0.0
    %590 = vmatprep.subr.mxu0 0.0
    %591 = vmatpush1.msra.mxu0 0.0
    %592 = vmatprep.subr.mxu0 0.0
    %593 = vmatpush1.msra.mxu0 0.0
    %594 = vmatprep.subr.mxu0 0.0
    %595 = vmatpush1.msra.mxu0 0.0
    %596 = vmatprep.subr.mxu0 0.0
    %597 = vmatpush1.msra.mxu0 0.0
    %598 = vmatprep.subr.mxu0 0.0
    %599 = vmatpush1.msra.mxu0 0.0
    %600 = vmatprep.subr.mxu0 0.0
    %601 = vmatpush1.msra.mxu0 0.0
    %602 = vmatprep.subr.mxu0 0.0
    %603 = vmatpush1.msra.mxu0 0.0
    %604 = vmatprep.subr.mxu0 0.0
    %605 = vmatpush1.msra.mxu0 0.0
    %606 = vmatprep.subr.mxu0 0.0
    %607 = vmatpush1.msra.mxu0 0.0
    %608 = vmatprep.subr.mxu0 0.0
    %609 = vmatpush1.msra.mxu0 0.0
    %610 = vmatprep.subr.mxu0 0.0
    %611 = vmatpush1.msra.mxu0 0.0
    %612 = vmatprep.subr.mxu0 0.0
    %613 = vmatpush1.msra.mxu0 0.0
    %614 = vmatprep.subr.mxu0 0.0
    %615 = vmatpush1.msra.mxu0 0.0
    %616 = vmatprep.subr.mxu0 0.0
    %617 = vmatpush1.msra.mxu0 0.0
    %618 = vmatprep.subr.mxu0 0.0
    %619 = vmatpush1.msra.mxu0 0.0
    %620 = vmatprep.subr.mxu0 0.0
    %621 = vmatpush1.msra.mxu0 0.0
    %622 = vmatprep.mubr.f32.mxu0 0.0
    %623 = vmatmul.mubr.f32.gmra.mrb[0].mxu0 %v556
    %v624 = vpop.f32.mrb[0].mxu0
    %v625 = vadd.f32 0.0, %v624
    %v626 = vpop.f32.mrb[0].mxu0
    %627 = vdwg.mxu0
    %v628 = vadd.f32 %v281, %v625
    %v629 = vxor.u32 %v628, 2147483648
    %v630 = vmul.f32 %v629, 1.442695
    %v631 = vpow.pop %v630
    %v632 = vadd.f32 %v631, 1.0
    %v633 = vrcp.pop %v632
    %v634 = vmul.f32 1.0, %v633
    %v635 = vadd.f32 %v625, %v395
    %v638 = vunpack.c.l.s4 1983009808
    %v639 = vunpack.c.0.s8 %v638
    %v640 = vlaneseq
    %v641 = vshrl.u32 %v640, 7
    %v642 = vsub.s32 %v639, %v641
    %v643 = vrot.slane %v635, %v642
    %644 = vrot.lane.b32.xlu0 %v643, 64
    %v645 = vpop.permute.xlu0 %644
    %v647 = vmul.f32 %v634, %v645
    %649 = vrot.lane.b32.xlu0 %v647, 64
    %v650 = vpop.permute.xlu0 %649
    %v652 = vadd.f32 %v281, %v650
    %v653 = vtanh.pop %v652
    %v654 = vsub.f32 1.0, %v634
    %656 = vrot.lane.b32.xlu0 %v653, 96
    %v657 = vpop.permute.xlu0 %656
    %v659 = vmul.f32 %v654, %v657
    %v660 = vmul.f32 %v634, %v542
    %v661 = vadd.f32 %v659, %v660
    %v664 = vunpack.c.l.s4 1983009808
    %v665 = vunpack.c.0.s8 %v664
    %v666 = vlaneseq
    %v667 = vshrl.u32 %v666, 7
    %v668 = vsub.s32 %v665, %v667
    %v669 = vrot.slane %v661, %v668
    %670 = vrot.lane.b32.xlu0 %v669, 96
    %v671 = vpop.permute.xlu0 %670
    %s673 = scalar_lea.vmem [#allocation8], 4
    %674 = vst.msk [vmem:[%s673] sm:$0x3] %vm435, %v671
    %v675 = vsel %vm183, %v671, 0
    %677 = vmatprep.subr.mxu0 0.0
    %678 = vmatpush1.msra.mxu0 %v80
    %679 = vmatprep.subr.mxu0 0.0
    %680 = vmatpush1.msra.mxu0 %v81
    %681 = vmatprep.subr.mxu0 0.0
    %682 = vmatpush1.msra.mxu0 %v82
    %683 = vmatprep.subr.mxu0 0.0
    %684 = vmatpush1.msra.mxu0 %v83
    %685 = vmatprep.subr.mxu0 0.0
    %686 = vmatpush1.msra.mxu0 0.0
    %687 = vmatprep.subr.mxu0 0.0
    %688 = vmatpush1.msra.mxu0 0.0
    %689 = vmatprep.subr.mxu0 0.0
    %690 = vmatpush1.msra.mxu0 0.0
    %691 = vmatprep.subr.mxu0 0.0
    %692 = vmatpush1.msra.mxu0 0.0
    %693 = vmatprep.subr.mxu0 0.0
    %694 = vmatpush1.msra.mxu0 0.0
    %695 = vmatprep.subr.mxu0 0.0
    %696 = vmatpush1.msra.mxu0 0.0
    %697 = vmatprep.subr.mxu0 0.0
    %698 = vmatpush1.msra.mxu0 0.0
    %699 = vmatprep.subr.mxu0 0.0
    %700 = vmatpush1.msra.mxu0 0.0
    %701 = vmatprep.subr.mxu0 0.0
    %702 = vmatpush1.msra.mxu0 0.0
    %703 = vmatprep.subr.mxu0 0.0
    %704 = vmatpush1.msra.mxu0 0.0
    %705 = vmatprep.subr.mxu0 0.0
    %706 = vmatpush1.msra.mxu0 0.0
    %707 = vmatprep.subr.mxu0 0.0
    %708 = vmatpush1.msra.mxu0 0.0
    %709 = vmatprep.subr.mxu0 0.0
    %710 = vmatpush1.msra.mxu0 0.0
    %711 = vmatprep.subr.mxu0 0.0
    %712 = vmatpush1.msra.mxu0 0.0
    %713 = vmatprep.subr.mxu0 0.0
    %714 = vmatpush1.msra.mxu0 0.0
    %715 = vmatprep.subr.mxu0 0.0
    %716 = vmatpush1.msra.mxu0 0.0
    %717 = vmatprep.subr.mxu0 0.0
    %718 = vmatpush1.msra.mxu0 0.0
    %719 = vmatprep.subr.mxu0 0.0
    %720 = vmatpush1.msra.mxu0 0.0
    %721 = vmatprep.subr.mxu0 0.0
    %722 = vmatpush1.msra.mxu0 0.0
    %723 = vmatprep.subr.mxu0 0.0
    %724 = vmatpush1.msra.mxu0 0.0
    %725 = vmatprep.subr.mxu0 0.0
    %726 = vmatpush1.msra.mxu0 0.0
    %727 = vmatprep.subr.mxu0 0.0
    %728 = vmatpush1.msra.mxu0 0.0
    %729 = vmatprep.subr.mxu0 0.0
    %730 = vmatpush1.msra.mxu0 0.0
    %731 = vmatprep.subr.mxu0 0.0
    %732 = vmatpush1.msra.mxu0 0.0
    %733 = vmatprep.subr.mxu0 0.0
    %734 = vmatpush1.msra.mxu0 0.0
    %735 = vmatprep.subr.mxu0 0.0
    %736 = vmatpush1.msra.mxu0 0.0
    %737 = vmatprep.subr.mxu0 0.0
    %738 = vmatpush1.msra.mxu0 0.0
    %739 = vmatprep.subr.mxu0 0.0
    %740 = vmatpush1.msra.mxu0 0.0
    %741 = vmatprep.mubr.f32.mxu0 0.0
    %742 = vmatmul.mubr.f32.gmra.mrb[0].mxu0 %v675
    %v743 = vpop.f32.mrb[0].mxu0
    %v744 = vadd.f32 0.0, %v743
    %v745 = vpop.f32.mrb[0].mxu0
    %746 = vdwg.mxu0
    %v747 = vadd.f32 %v283, %v744
    %v748 = vxor.u32 %v747, 2147483648
    %v749 = vmul.f32 %v748, 1.442695
    %v750 = vpow.pop %v749
    %v751 = vadd.f32 %v750, 1.0
    %v752 = vrcp.pop %v751
    %v753 = vmul.f32 1.0, %v752
    %v754 = vadd.f32 %v744, %v395
    %v757 = vunpack.c.l.s4 1983009808
    %v758 = vunpack.c.0.s8 %v757
    %v759 = vlaneseq
    %v760 = vshrl.u32 %v759, 7
    %v761 = vsub.s32 %v758, %v760
    %v762 = vrot.slane %v754, %v761
    %763 = vrot.lane.b32.xlu0 %v762, 64
    %v764 = vpop.permute.xlu0 %763
    %v766 = vmul.f32 %v753, %v764
    %768 = vrot.lane.b32.xlu0 %v766, 64
    %v769 = vpop.permute.xlu0 %768
    %v771 = vadd.f32 %v283, %v769
    %v772 = vtanh.pop %v771
    %v773 = vsub.f32 1.0, %v753
    %775 = vrot.lane.b32.xlu0 %v772, 96
    %v776 = vpop.permute.xlu0 %775
    %v778 = vmul.f32 %v773, %v776
    %v779 = vmul.f32 %v753, %v661
    %v780 = vadd.f32 %v778, %v779
    %v783 = vunpack.c.l.s4 1983009808
    %v784 = vunpack.c.0.s8 %v783
    %v785 = vlaneseq
    %v786 = vshrl.u32 %v785, 7
    %v787 = vsub.s32 %v784, %v786
    %v788 = vrot.slane %v780, %v787
    %789 = vrot.lane.b32.xlu0 %v788, 96
    %v790 = vpop.permute.xlu0 %789
    %s792 = scalar_lea.vmem [#allocation8], 6
    %793 = vst.msk [vmem:[%s792] sm:$0x3] %vm435, %v790
    %v794 = vsel %vm183, %v790, 0
    %796 = vmatprep.subr.mxu0 0.0
    %797 = vmatpush1.msra.mxu0 %v80
    %798 = vmatprep.subr.mxu0 0.0
    %799 = vmatpush1.msra.mxu0 %v81
    %800 = vmatprep.subr.mxu0 0.0
    %801 = vmatpush1.msra.mxu0 %v82
    %802 = vmatprep.subr.mxu0 0.0
    %803 = vmatpush1.msra.mxu0 %v83
    %804 = vmatprep.subr.mxu0 0.0
    %805 = vmatpush1.msra.mxu0 0.0
    %806 = vmatprep.subr.mxu0 0.0
    %807 = vmatpush1.msra.mxu0 0.0
    %808 = vmatprep.subr.mxu0 0.0
    %809 = vmatpush1.msra.mxu0 0.0
    %810 = vmatprep.subr.mxu0 0.0
    %811 = vmatpush1.msra.mxu0 0.0
    %812 = vmatprep.subr.mxu0 0.0
    %813 = vmatpush1.msra.mxu0 0.0
    %814 = vmatprep.subr.mxu0 0.0
    %815 = vmatpush1.msra.mxu0 0.0
    %816 = vmatprep.subr.mxu0 0.0
    %817 = vmatpush1.msra.mxu0 0.0
    %818 = vmatprep.subr.mxu0 0.0
    %819 = vmatpush1.msra.mxu0 0.0
    %820 = vmatprep.subr.mxu0 0.0
    %821 = vmatpush1.msra.mxu0 0.0
    %822 = vmatprep.subr.mxu0 0.0
    %823 = vmatpush1.msra.mxu0 0.0
    %824 = vmatprep.subr.mxu0 0.0
    %825 = vmatpush1.msra.mxu0 0.0
    %826 = vmatprep.subr.mxu0 0.0
    %827 = vmatpush1.msra.mxu0 0.0
    %828 = vmatprep.subr.mxu0 0.0
    %829 = vmatpush1.msra.mxu0 0.0
    %830 = vmatprep.subr.mxu0 0.0
    %831 = vmatpush1.msra.mxu0 0.0
    %832 = vmatprep.subr.mxu0 0.0
    %833 = vmatpush1.msra.mxu0 0.0
    %834 = vmatprep.subr.mxu0 0.0
    %835 = vmatpush1.msra.mxu0 0.0
    %836 = vmatprep.subr.mxu0 0.0
    %837 = vmatpush1.msra.mxu0 0.0
    %838 = vmatprep.subr.mxu0 0.0
    %839 = vmatpush1.msra.mxu0 0.0
    %840 = vmatprep.subr.mxu0 0.0
    %841 = vmatpush1.msra.mxu0 0.0
    %842 = vmatprep.subr.mxu0 0.0
    %843 = vmatpush1.msra.mxu0 0.0
    %844 = vmatprep.subr.mxu0 0.0
    %845 = vmatpush1.msra.mxu0 0.0
    %846 = vmatprep.subr.mxu0 0.0
    %847 = vmatpush1.msra.mxu0 0.0
    %848 = vmatprep.subr.mxu0 0.0
    %849 = vmatpush1.msra.mxu0 0.0
    %850 = vmatprep.subr.mxu0 0.0
    %851 = vmatpush1.msra.mxu0 0.0
    %852 = vmatprep.subr.mxu0 0.0
    %853 = vmatpush1.msra.mxu0 0.0
    %854 = vmatprep.subr.mxu0 0.0
    %855 = vmatpush1.msra.mxu0 0.0
    %856 = vmatprep.subr.mxu0 0.0
    %857 = vmatpush1.msra.mxu0 0.0
    %858 = vmatprep.subr.mxu0 0.0
    %859 = vmatpush1.msra.mxu0 0.0
    %860 = vmatprep.mubr.f32.mxu0 0.0
    %861 = vmatmul.mubr.f32.gmra.mrb[0].mxu0 %v794
    %v862 = vpop.f32.mrb[0].mxu0
    %v863 = vadd.f32 0.0, %v862
    %v864 = vpop.f32.mrb[0].mxu0
    %865 = vdwg.mxu0
    %v866 = vadd.f32 %v291, %v863
    %v867 = vxor.u32 %v866, 2147483648
    %v868 = vmul.f32 %v867, 1.442695
    %v869 = vpow.pop %v868
    %v870 = vadd.f32 %v869, 1.0
    %v871 = vrcp.pop %v870
    %v872 = vmul.f32 1.0, %v871
    %v873 = vadd.f32 %v863, %v395
    %v876 = vunpack.c.l.s4 1983009808
    %v877 = vunpack.c.0.s8 %v876
    %v878 = vlaneseq
    %v879 = vshrl.u32 %v878, 7
    %v880 = vsub.s32 %v877, %v879
    %v881 = vrot.slane %v873, %v880
    %882 = vrot.lane.b32.xlu0 %v881, 64
    %v883 = vpop.permute.xlu0 %882
    %v885 = vmul.f32 %v872, %v883
    %887 = vrot.lane.b32.xlu0 %v885, 64
    %v888 = vpop.permute.xlu0 %887
    %v890 = vadd.f32 %v291, %v888
    %v891 = vtanh.pop %v890
    %v892 = vsub.f32 1.0, %v872
    %894 = vrot.lane.b32.xlu0 %v891, 96
    %v895 = vpop.permute.xlu0 %894
    %v897 = vmul.f32 %v892, %v895
    %v898 = vmul.f32 %v872, %v780
    %v899 = vadd.f32 %v897, %v898
    %v902 = vunpack.c.l.s4 1983009808
    %v903 = vunpack.c.0.s8 %v902
    %v904 = vlaneseq
    %v905 = vshrl.u32 %v904, 7
    %v906 = vsub.s32 %v903, %v905
    %v907 = vrot.slane %v899, %v906
    %908 = vrot.lane.b32.xlu0 %v907, 96
    %v909 = vpop.permute.xlu0 %908
    %s911 = scalar_lea.vmem [#allocation8], 8
    %912 = vst.msk [vmem:[%s911] sm:$0x3] %vm435, %v909
    %v913 = vsel %vm183, %v909, 0
    %915 = vmatprep.subr.mxu0 0.0
    %916 = vmatpush1.msra.mxu0 %v80
    %917 = vmatprep.subr.mxu0 0.0
    %918 = vmatpush1.msra.mxu0 %v81
    %919 = vmatprep.subr.mxu0 0.0
    %920 = vmatpush1.msra.mxu0 %v82
    %921 = vmatprep.subr.mxu0 0.0
    %922 = vmatpush1.msra.mxu0 %v83
    %923 = vmatprep.subr.mxu0 0.0
    %924 = vmatpush1.msra.mxu0 0.0
    %925 = vmatprep.subr.mxu0 0.0
    %926 = vmatpush1.msra.mxu0 0.0
    %927 = vmatprep.subr.mxu0 0.0
    %928 = vmatpush1.msra.mxu0 0.0
    %929 = vmatprep.subr.mxu0 0.0
    %930 = vmatpush1.msra.mxu0 0.0
    %931 = vmatprep.subr.mxu0 0.0
    %932 = vmatpush1.msra.mxu0 0.0
    %933 = vmatprep.subr.mxu0 0.0
    %934 = vmatpush1.msra.mxu0 0.0
    %935 = vmatprep.subr.mxu0 0.0
    %936 = vmatpush1.msra.mxu0 0.0
    %937 = vmatprep.subr.mxu0 0.0
    %938 = vmatpush1.msra.mxu0 0.0
    %939 = vmatprep.subr.mxu0 0.0
    %940 = vmatpush1.msra.mxu0 0.0
    %941 = vmatprep.subr.mxu0 0.0
    %942 = vmatpush1.msra.mxu0 0.0
    %943 = vmatprep.subr.mxu0 0.0
    %944 = vmatpush1.msra.mxu0 0.0
    %945 = vmatprep.subr.mxu0 0.0
    %946 = vmatpush1.msra.mxu0 0.0
    %947 = vmatprep.subr.mxu0 0.0
    %948 = vmatpush1.msra.mxu0 0.0
    %949 = vmatprep.subr.mxu0 0.0
    %950 = vmatpush1.msra.mxu0 0.0
    %951 = vmatprep.subr.mxu0 0.0
    %952 = vmatpush1.msra.mxu0 0.0
    %953 = vmatprep.subr.mxu0 0.0
    %954 = vmatpush1.msra.mxu0 0.0
    %955 = vmatprep.subr.mxu0 0.0
    %956 = vmatpush1.msra.mxu0 0.0
    %957 = vmatprep.subr.mxu0 0.0
    %958 = vmatpush1.msra.mxu0 0.0
    %959 = vmatprep.subr.mxu0 0.0
    %960 = vmatpush1.msra.mxu0 0.0
    %961 = vmatprep.subr.mxu0 0.0
    %962 = vmatpush1.msra.mxu0 0.0
    %963 = vmatprep.subr.mxu0 0.0
    %964 = vmatpush1.msra.mxu0 0.0
    %965 = vmatprep.subr.mxu0 0.0
    %966 = vmatpush1.msra.mxu0 0.0
    %967 = vmatprep.subr.mxu0 0.0
    %968 = vmatpush1.msra.mxu0 0.0
    %969 = vmatprep.subr.mxu0 0.0
    %970 = vmatpush1.msra.mxu0 0.0
    %971 = vmatprep.subr.mxu0 0.0
    %972 = vmatpush1.msra.mxu0 0.0
    %973 = vmatprep.subr.mxu0 0.0
    %974 = vmatpush1.msra.mxu0 0.0
    %975 = vmatprep.subr.mxu0 0.0
    %976 = vmatpush1.msra.mxu0 0.0
    %977 = vmatprep.subr.mxu0 0.0
    %978 = vmatpush1.msra.mxu0 0.0
    %979 = vmatprep.mubr.f32.mxu0 0.0
    %980 = vmatmul.mubr.f32.gmra.mrb[0].mxu0 %v913
    %v981 = vpop.f32.mrb[0].mxu0
    %v982 = vadd.f32 0.0, %v981
    %v983 = vpop.f32.mrb[0].mxu0
    %984 = vdwg.mxu0
    %v985 = vadd.f32 %v299, %v982
    %v986 = vxor.u32 %v985, 2147483648
    %v987 = vmul.f32 %v986, 1.442695
    %v988 = vpow.pop %v987
    %v989 = vadd.f32 %v988, 1.0
    %v990 = vrcp.pop %v989
    %v991 = vmul.f32 1.0, %v990
    %v992 = vadd.f32 %v982, %v395
    %v995 = vunpack.c.l.s4 1983009808
    %v996 = vunpack.c.0.s8 %v995
    %v997 = vlaneseq
    %v998 = vshrl.u32 %v997, 7
    %v999 = vsub.s32 %v996, %v998
    %v1000 = vrot.slane %v992, %v999
    %1001 = vrot.lane.b32.xlu0 %v1000, 64
    %v1002 = vpop.permute.xlu0 %1001
    %v1004 = vmul.f32 %v991, %v1002
    %1006 = vrot.lane.b32.xlu0 %v1004, 64
    %v1007 = vpop.permute.xlu0 %1006
    %v1009 = vadd.f32 %v299, %v1007
    %v1010 = vtanh.pop %v1009
    %v1011 = vsub.f32 1.0, %v991
    %1013 = vrot.lane.b32.xlu0 %v1010, 96
    %v1014 = vpop.permute.xlu0 %1013
    %v1016 = vmul.f32 %v1011, %v1014
    %v1017 = vmul.f32 %v991, %v899
    %v1018 = vadd.f32 %v1016, %v1017
    %v1021 = vunpack.c.l.s4 1983009808
    %v1022 = vunpack.c.0.s8 %v1021
    %v1023 = vlaneseq
    %v1024 = vshrl.u32 %v1023, 7
    %v1025 = vsub.s32 %v1022, %v1024
    %v1026 = vrot.slane %v1018, %v1025
    %1027 = vrot.lane.b32.xlu0 %v1026, 96
    %v1028 = vpop.permute.xlu0 %1027
    %s1030 = scalar_lea.vmem [#allocation8], 10
    %1031 = vst.msk [vmem:[%s1030] sm:$0x3] %vm435, %v1028
    %v1032 = vsel %vm183, %v1028, 0
    %1034 = vmatprep.subr.mxu0 0.0
    %1035 = vmatpush1.msra.mxu0 %v80
    %1036 = vmatprep.subr.mxu0 0.0
    %1037 = vmatpush1.msra.mxu0 %v81
    %1038 = vmatprep.subr.mxu0 0.0
    %1039 = vmatpush1.msra.mxu0 %v82
    %1040 = vmatprep.subr.mxu0 0.0
    %1041 = vmatpush1.msra.mxu0 %v83
    %1042 = vmatprep.subr.mxu0 0.0
    %1043 = vmatpush1.msra.mxu0 0.0
    %1044 = vmatprep.subr.mxu0 0.0
    %1045 = vmatpush1.msra.mxu0 0.0
    %1046 = vmatprep.subr.mxu0 0.0
    %1047 = vmatpush1.msra.mxu0 0.0
    %1048 = vmatprep.subr.mxu0 0.0
    %1049 = vmatpush1.msra.mxu0 0.0
    %1050 = vmatprep.subr.mxu0 0.0
    %1051 = vmatpush1.msra.mxu0 0.0
    %1052 = vmatprep.subr.mxu0 0.0
    %1053 = vmatpush1.msra.mxu0 0.0
    %1054 = vmatprep.subr.mxu0 0.0
    %1055 = vmatpush1.msra.mxu0 0.0
    %1056 = vmatprep.subr.mxu0 0.0
    %1057 = vmatpush1.msra.mxu0 0.0
    %1058 = vmatprep.subr.mxu0 0.0
    %1059 = vmatpush1.msra.mxu0 0.0
    %1060 = vmatprep.subr.mxu0 0.0
    %1061 = vmatpush1.msra.mxu0 0.0
    %1062 = vmatprep.subr.mxu0 0.0
    %1063 = vmatpush1.msra.mxu0 0.0
    %1064 = vmatprep.subr.mxu0 0.0
    %1065 = vmatpush1.msra.mxu0 0.0
    %1066 = vmatprep.subr.mxu0 0.0
    %1067 = vmatpush1.msra.mxu0 0.0
    %1068 = vmatprep.subr.mxu0 0.0
    %1069 = vmatpush1.msra.mxu0 0.0
    %1070 = vmatprep.subr.mxu0 0.0
    %1071 = vmatpush1.msra.mxu0 0.0
    %1072 = vmatprep.subr.mxu0 0.0
    %1073 = vmatpush1.msra.mxu0 0.0
    %1074 = vmatprep.subr.mxu0 0.0
    %1075 = vmatpush1.msra.mxu0 0.0
    %1076 = vmatprep.subr.mxu0 0.0
    %1077 = vmatpush1.msra.mxu0 0.0
    %1078 = vmatprep.subr.mxu0 0.0
    %1079 = vmatpush1.msra.mxu0 0.0
    %1080 = vmatprep.subr.mxu0 0.0
    %1081 = vmatpush1.msra.mxu0 0.0
    %1082 = vmatprep.subr.mxu0 0.0
    %1083 = vmatpush1.msra.mxu0 0.0
    %1084 = vmatprep.subr.mxu0 0.0
    %1085 = vmatpush1.msra.mxu0 0.0
    %1086 = vmatprep.subr.mxu0 0.0
    %1087 = vmatpush1.msra.mxu0 0.0
    %1088 = vmatprep.subr.mxu0 0.0
    %1089 = vmatpush1.msra.mxu0 0.0
    %1090 = vmatprep.subr.mxu0 0.0
    %1091 = vmatpush1.msra.mxu0 0.0
    %1092 = vmatprep.subr.mxu0 0.0
    %1093 = vmatpush1.msra.mxu0 0.0
    %1094 = vmatprep.subr.mxu0 0.0
    %1095 = vmatpush1.msra.mxu0 0.0
    %1096 = vmatprep.subr.mxu0 0.0
    %1097 = vmatpush1.msra.mxu0 0.0
    %1098 = vmatprep.mubr.f32.mxu0 0.0
    %1099 = vmatmul.mubr.f32.gmra.mrb[0].mxu0 %v1032
    %v1100 = vpop.f32.mrb[0].mxu0
    %v1101 = vadd.f32 0.0, %v1100
    %v1102 = vpop.f32.mrb[0].mxu0
    %1103 = vdwg.mxu0
    %v1104 = vadd.f32 %v298, %v1101
    %v1105 = vxor.u32 %v1104, 2147483648
    %v1106 = vmul.f32 %v1105, 1.442695
    %v1107 = vpow.pop %v1106
    %v1108 = vadd.f32 %v1107, 1.0
    %v1109 = vrcp.pop %v1108
    %v1110 = vmul.f32 1.0, %v1109
    %v1111 = vadd.f32 %v1101, %v395
    %v1114 = vunpack.c.l.s4 1983009808
    %v1115 = vunpack.c.0.s8 %v1114
    %v1116 = vlaneseq
    %v1117 = vshrl.u32 %v1116, 7
    %v1118 = vsub.s32 %v1115, %v1117
    %v1119 = vrot.slane %v1111, %v1118
    %1120 = vrot.lane.b32.xlu0 %v1119, 64
    %v1121 = vpop.permute.xlu0 %1120
    %v1123 = vmul.f32 %v1110, %v1121
    %1125 = vrot.lane.b32.xlu0 %v1123, 64
    %v1126 = vpop.permute.xlu0 %1125
    %v1128 = vadd.f32 %v298, %v1126
    %v1129 = vtanh.pop %v1128
    %v1130 = vsub.f32 1.0, %v1110
    %1132 = vrot.lane.b32.xlu0 %v1129, 96
    %v1133 = vpop.permute.xlu0 %1132
    %v1135 = vmul.f32 %v1130, %v1133
    %v1136 = vmul.f32 %v1110, %v1018
    %v1137 = vadd.f32 %v1135, %v1136
    %v1140 = vunpack.c.l.s4 1983009808
    %v1141 = vunpack.c.0.s8 %v1140
    %v1142 = vlaneseq
    %v1143 = vshrl.u32 %v1142, 7
    %v1144 = vsub.s32 %v1141, %v1143
    %v1145 = vrot.slane %v1137, %v1144
    %1146 = vrot.lane.b32.xlu0 %v1145, 96
    %v1147 = vpop.permute.xlu0 %1146
    %s1149 = scalar_lea.vmem [#allocation8], 12
    %1150 = vst.msk [vmem:[%s1149] sm:$0x3] %vm435, %v1147
    %v1151 = vsel %vm183, %v1147, 0
    %1153 = vmatprep.subr.mxu0 0.0
    %1154 = vmatpush1.msra.mxu0 %v80
    %1155 = vmatprep.subr.mxu0 0.0
    %1156 = vmatpush1.msra.mxu0 %v81
    %1157 = vmatprep.subr.mxu0 0.0
    %1158 = vmatpush1.msra.mxu0 %v82
    %1159 = vmatprep.subr.mxu0 0.0
    %1160 = vmatpush1.msra.mxu0 %v83
    %1161 = vmatprep.subr.mxu0 0.0
    %1162 = vmatpush1.msra.mxu0 0.0
    %1163 = vmatprep.subr.mxu0 0.0
    %1164 = vmatpush1.msra.mxu0 0.0
    %1165 = vmatprep.subr.mxu0 0.0
    %1166 = vmatpush1.msra.mxu0 0.0
    %1167 = vmatprep.subr.mxu0 0.0
    %1168 = vmatpush1.msra.mxu0 0.0
    %1169 = vmatprep.subr.mxu0 0.0
    %1170 = vmatpush1.msra.mxu0 0.0
    %1171 = vmatprep.subr.mxu0 0.0
    %1172 = vmatpush1.msra.mxu0 0.0
    %1173 = vmatprep.subr.mxu0 0.0
    %1174 = vmatpush1.msra.mxu0 0.0
    %1175 = vmatprep.subr.mxu0 0.0
    %1176 = vmatpush1.msra.mxu0 0.0
    %1177 = vmatprep.subr.mxu0 0.0
    %1178 = vmatpush1.msra.mxu0 0.0
    %1179 = vmatprep.subr.mxu0 0.0
    %1180 = vmatpush1.msra.mxu0 0.0
    %1181 = vmatprep.subr.mxu0 0.0
    %1182 = vmatpush1.msra.mxu0 0.0
    %1183 = vmatprep.subr.mxu0 0.0
    %1184 = vmatpush1.msra.mxu0 0.0
    %1185 = vmatprep.subr.mxu0 0.0
    %1186 = vmatpush1.msra.mxu0 0.0
    %1187 = vmatprep.subr.mxu0 0.0
    %1188 = vmatpush1.msra.mxu0 0.0
    %1189 = vmatprep.subr.mxu0 0.0
    %1190 = vmatpush1.msra.mxu0 0.0
    %1191 = vmatprep.subr.mxu0 0.0
    %1192 = vmatpush1.msra.mxu0 0.0
    %1193 = vmatprep.subr.mxu0 0.0
    %1194 = vmatpush1.msra.mxu0 0.0
    %1195 = vmatprep.subr.mxu0 0.0
    %1196 = vmatpush1.msra.mxu0 0.0
    %1197 = vmatprep.subr.mxu0 0.0
    %1198 = vmatpush1.msra.mxu0 0.0
    %1199 = vmatprep.subr.mxu0 0.0
    %1200 = vmatpush1.msra.mxu0 0.0
    %1201 = vmatprep.subr.mxu0 0.0
    %1202 = vmatpush1.msra.mxu0 0.0
    %1203 = vmatprep.subr.mxu0 0.0
    %1204 = vmatpush1.msra.mxu0 0.0
    %1205 = vmatprep.subr.mxu0 0.0
    %1206 = vmatpush1.msra.mxu0 0.0
    %1207 = vmatprep.subr.mxu0 0.0
    %1208 = vmatpush1.msra.mxu0 0.0
    %1209 = vmatprep.subr.mxu0 0.0
    %1210 = vmatpush1.msra.mxu0 0.0
    %1211 = vmatprep.subr.mxu0 0.0
    %1212 = vmatpush1.msra.mxu0 0.0
    %1213 = vmatprep.subr.mxu0 0.0
    %1214 = vmatpush1.msra.mxu0 0.0
    %1215 = vmatprep.subr.mxu0 0.0
    %1216 = vmatpush1.msra.mxu0 0.0
    %1217 = vmatprep.mubr.f32.mxu0 0.0
    %1218 = vmatmul.mubr.f32.gmra.mrb[0].mxu0 %v1151
    %v1219 = vpop.f32.mrb[0].mxu0
    %v1220 = vadd.f32 0.0, %v1219
    %v1221 = vpop.f32.mrb[0].mxu0
    %1222 = vdwg.mxu0
    %v1223 = vadd.f32 %v300, %v1220
    %v1224 = vxor.u32 %v1223, 2147483648
    %v1225 = vmul.f32 %v1224, 1.442695
    %v1226 = vpow.pop %v1225
    %v1227 = vadd.f32 %v1226, 1.0
    %v1228 = vrcp.pop %v1227
    %v1229 = vmul.f32 1.0, %v1228
    %v1230 = vadd.f32 %v1220, %v395
    %v1233 = vunpack.c.l.s4 1983009808
    %v1234 = vunpack.c.0.s8 %v1233
    %v1235 = vlaneseq
    %v1236 = vshrl.u32 %v1235, 7
    %v1237 = vsub.s32 %v1234, %v1236
    %v1238 = vrot.slane %v1230, %v1237
    %1239 = vrot.lane.b32.xlu0 %v1238, 64
    %v1240 = vpop.permute.xlu0 %1239
    %v1242 = vmul.f32 %v1229, %v1240
    %1244 = vrot.lane.b32.xlu0 %v1242, 64
    %v1245 = vpop.permute.xlu0 %1244
    %v1247 = vadd.f32 %v300, %v1245
    %v1248 = vtanh.pop %v1247
    %v1249 = vsub.f32 1.0, %v1229
    %1251 = vrot.lane.b32.xlu0 %v1248, 96
    %v1252 = vpop.permute.xlu0 %1251
    %v1254 = vmul.f32 %v1249, %v1252
    %v1255 = vmul.f32 %v1229, %v1137
    %v1256 = vadd.f32 %v1254, %v1255
    %v1259 = vunpack.c.l.s4 1983009808
    %v1260 = vunpack.c.0.s8 %v1259
    %v1261 = vlaneseq
    %v1262 = vshrl.u32 %v1261, 7
    %v1263 = vsub.s32 %v1260, %v1262
    %v1264 = vrot.slane %v1256, %v1263
    %1265 = vrot.lane.b32.xlu0 %v1264, 96
    %v1266 = vpop.permute.xlu0 %1265
    %s1268 = scalar_lea.vmem [#allocation8], 14
    %1269 = vst.msk [vmem:[%s1268] sm:$0x3] %vm435, %v1266
    %v1270 = vld [vmem:[#allocation8] sm:$0x3]
    %v1271 = vld [vmem:[#allocation8 + $0x2] sm:$0x3]
    %v1272 = vld [vmem:[#allocation8 + $0x4] sm:$0x3]
    %v1273 = vld [vmem:[#allocation8 + $0x6] sm:$0x3]
    %v1274 = vld [vmem:[#allocation8 + $0x8] sm:$0x3]
    %v1275 = vld [vmem:[#allocation8 + $0xa] sm:$0x3]
    %v1276 = vld [vmem:[#allocation8 + $0xc] sm:$0x3]
    %v1277 = vld [vmem:[#allocation8 + $0xe] sm:$0x3]
    %v1279 = vlaneseq
    %v1280 = vshrl.u32 %v1279, 7
    %v1281 = vsub.s32 0, %v1280
    %v1282 = vrot.slane %v90, %v1281
    %v1292 = vcombine.low %v1270, %v1271
    %v1293 = vcombine.low %v1272, %v1273
    %v1295 = vunpack.c.l.s4 1983009808
    %v1296 = vunpack.c.0.s8 %v1295
    %v1297 = vlaneseq
    %v1298 = vshrl.u32 %v1297, 7
    %v1299 = vsub.s32 %v1296, %v1298
    %v1300 = vrot.slane %v1292, %v1299
    %v1302 = vunpack.c.l.s4 1983009808
    %v1303 = vunpack.c.0.s8 %v1302
    %v1304 = vlaneseq
    %v1305 = vshrl.u32 %v1304, 7
    %v1306 = vsub.s32 %v1303, %v1305
    %v1307 = vrot.slane %v1293, %v1306
    %v1308 = vcombine.low %v1300, %v1307
    %v1309 = vcombine.low %v1274, %v1275
    %v1310 = vcombine.low %v1276, %v1277
    %v1312 = vunpack.c.l.s4 1983009808
    %v1313 = vunpack.c.0.s8 %v1312
    %v1314 = vlaneseq
    %v1315 = vshrl.u32 %v1314, 7
    %v1316 = vsub.s32 %v1313, %v1315
    %v1317 = vrot.slane %v1309, %v1316
    %v1319 = vunpack.c.l.s4 1983009808
    %v1320 = vunpack.c.0.s8 %v1319
    %v1321 = vlaneseq
    %v1322 = vshrl.u32 %v1321, 7
    %v1323 = vsub.s32 %v1320, %v1322
    %v1324 = vrot.slane %v1310, %v1323
    %v1325 = vcombine.low %v1317, %v1324
    %v1326 = vsel %vm183, %v1308, 0
    %v1328 = vsel %vm183, %v1325, 0
    %1330 = vmatprep.subr.mxu0 0.0
    %1331 = vmatpush1.msra.mxu0 %v86
    %1332 = vmatprep.subr.mxu0 0.0
    %1333 = vmatpush1.msra.mxu0 %v87
    %1334 = vmatprep.subr.mxu0 0.0
    %1335 = vmatpush1.msra.mxu0 %v88
    %1336 = vmatprep.subr.mxu0 0.0
    %1337 = vmatpush1.msra.mxu0 %v89
    %1338 = vmatprep.subr.mxu0 0.0
    %1339 = vmatpush1.msra.mxu0 0.0
    %1340 = vmatprep.subr.mxu0 0.0
    %1341 = vmatpush1.msra.mxu0 0.0
    %1342 = vmatprep.subr.mxu0 0.0
    %1343 = vmatpush1.msra.mxu0 0.0
    %1344 = vmatprep.subr.mxu0 0.0
    %1345 = vmatpush1.msra.mxu0 0.0
    %1346 = vmatprep.subr.mxu0 0.0
    %1347 = vmatpush1.msra.mxu0 0.0
    %1348 = vmatprep.subr.mxu0 0.0
    %1349 = vmatpush1.msra.mxu0 0.0
    %1350 = vmatprep.subr.mxu0 0.0
    %1351 = vmatpush1.msra.mxu0 0.0
    %1352 = vmatprep.subr.mxu0 0.0
    %1353 = vmatpush1.msra.mxu0 0.0
    %1354 = vmatprep.subr.mxu0 0.0
    %1355 = vmatpush1.msra.mxu0 0.0
    %1356 = vmatprep.subr.mxu0 0.0
    %1357 = vmatpush1.msra.mxu0 0.0
    %1358 = vmatprep.subr.mxu0 0.0
    %1359 = vmatpush1.msra.mxu0 0.0
    %1360 = vmatprep.subr.mxu0 0.0
    %1361 = vmatpush1.msra.mxu0 0.0
    %1362 = vmatprep.subr.mxu0 0.0
    %1363 = vmatpush1.msra.mxu0 0.0
    %1364 = vmatprep.subr.mxu0 0.0
    %1365 = vmatpush1.msra.mxu0 0.0
    %1366 = vmatprep.subr.mxu0 0.0
    %1367 = vmatpush1.msra.mxu0 0.0
    %1368 = vmatprep.subr.mxu0 0.0
    %1369 = vmatpush1.msra.mxu0 0.0
    %1370 = vmatprep.subr.mxu0 0.0
    %1371 = vmatpush1.msra.mxu0 0.0
    %1372 = vmatprep.subr.mxu0 0.0
    %1373 = vmatpush1.msra.mxu0 0.0
    %1374 = vmatprep.subr.mxu0 0.0
    %1375 = vmatpush1.msra.mxu0 0.0
    %1376 = vmatprep.subr.mxu0 0.0
    %1377 = vmatpush1.msra.mxu0 0.0
    %1378 = vmatprep.subr.mxu0 0.0
    %1379 = vmatpush1.msra.mxu0 0.0
    %1380 = vmatprep.subr.mxu0 0.0
    %1381 = vmatpush1.msra.mxu0 0.0
    %1382 = vmatprep.subr.mxu0 0.0
    %1383 = vmatpush1.msra.mxu0 0.0
    %1384 = vmatprep.subr.mxu0 0.0
    %1385 = vmatpush1.msra.mxu0 0.0
    %1386 = vmatprep.subr.mxu0 0.0
    %1387 = vmatpush1.msra.mxu0 0.0
    %1388 = vmatprep.subr.mxu0 0.0
    %1389 = vmatpush1.msra.mxu0 0.0
    %1390 = vmatprep.subr.mxu0 0.0
    %1391 = vmatpush1.msra.mxu0 0.0
    %1392 = vmatprep.subr.mxu0 0.0
    %1393 = vmatpush1.msra.mxu0 0.0
    %1394 = vmatprep.mubr.f32.mxu0 0.0
    %1395 = vmatmul.mubr.f32.gmra.mrb[0].mxu0 %v1326
    %v1396 = vpop.f32.mrb[0].mxu0
    %v1397 = vadd.f32 %v1282, %v1396
    %v1398 = vpop.f32.mrb[0].mxu0
    %1399 = vmatprep.mubr.f32.mxu0 0.0
    %1400 = vmatmul.mubr.f32.gmra.mrb[0].mxu0 %v1328
    %v1401 = vpop.f32.mrb[0].mxu0
    %v1402 = vadd.f32 %v1282, %v1401
    %v1403 = vpop.f32.mrb[0].mxu0
    %1404 = vdwg.mxu0
    %v1405 = vld [vmem:[#allocation2] sm:$0xff]
    %v1406 = vld [vmem:[#allocation2 + $0x8] sm:$0xff]
    %v1408 = vsel %vm95, %v1405, 0
    %v1411 = vsel %vm95, %v1406, 0
    %1413 = vmatprep.subr.mxu0 0.0
    %1414 = vmatpush1.msra.mxu0 %v1397
    %1415 = vmatprep.subr.mxu0 0.0
    %1416 = vmatpush1.msra.mxu0 %v1402
    %1417 = vmatprep.subr.mxu0 0.0
    %1418 = vmatpush1.msra.mxu0 0.0
    %1419 = vmatprep.subr.mxu0 0.0
    %1420 = vmatpush1.msra.mxu0 0.0
    %1421 = vmatprep.subr.mxu0 0.0
    %1422 = vmatpush1.msra.mxu0 0.0
    %1423 = vmatprep.subr.mxu0 0.0
    %1424 = vmatpush1.msra.mxu0 0.0
    %1425 = vmatprep.subr.mxu0 0.0
    %1426 = vmatpush1.msra.mxu0 0.0
    %1427 = vmatprep.subr.mxu0 0.0
    %1428 = vmatpush1.msra.mxu0 0.0
    %1429 = vmatprep.subr.mxu0 0.0
    %1430 = vmatpush1.msra.mxu0 0.0
    %1431 = vmatprep.subr.mxu0 0.0
    %1432 = vmatpush1.msra.mxu0 0.0
    %1433 = vmatprep.subr.mxu0 0.0
    %1434 = vmatpush1.msra.mxu0 0.0
    %1435 = vmatprep.subr.mxu0 0.0
    %1436 = vmatpush1.msra.mxu0 0.0
    %1437 = vmatprep.subr.mxu0 0.0
    %1438 = vmatpush1.msra.mxu0 0.0
    %1439 = vmatprep.subr.mxu0 0.0
    %1440 = vmatpush1.msra.mxu0 0.0
    %1441 = vmatprep.subr.mxu0 0.0
    %1442 = vmatpush1.msra.mxu0 0.0
    %1443 = vmatprep.subr.mxu0 0.0
    %1444 = vmatpush1.msra.mxu0 0.0
    %1445 = vmatprep.subr.mxu0 0.0
    %1446 = vmatpush1.msra.mxu0 0.0
    %1447 = vmatprep.subr.mxu0 0.0
    %1448 = vmatpush1.msra.mxu0 0.0
    %1449 = vmatprep.subr.mxu0 0.0
    %1450 = vmatpush1.msra.mxu0 0.0
    %1451 = vmatprep.subr.mxu0 0.0
    %1452 = vmatpush1.msra.mxu0 0.0
    %1453 = vmatprep.subr.mxu0 0.0
    %1454 = vmatpush1.msra.mxu0 0.0
    %1455 = vmatprep.subr.mxu0 0.0
    %1456 = vmatpush1.msra.mxu0 0.0
    %1457 = vmatprep.subr.mxu0 0.0
    %1458 = vmatpush1.msra.mxu0 0.0
    %1459 = vmatprep.subr.mxu0 0.0
    %1460 = vmatpush1.msra.mxu0 0.0
    %1461 = vmatprep.subr.mxu0 0.0
    %1462 = vmatpush1.msra.mxu0 0.0
    %1463 = vmatprep.subr.mxu0 0.0
    %1464 = vmatpush1.msra.mxu0 0.0
    %1465 = vmatprep.subr.mxu0 0.0
    %1466 = vmatpush1.msra.mxu0 0.0
    %1467 = vmatprep.subr.mxu0 0.0
    %1468 = vmatpush1.msra.mxu0 0.0
    %1469 = vmatprep.subr.mxu0 0.0
    %1470 = vmatpush1.msra.mxu0 0.0
    %1471 = vmatprep.subr.mxu0 0.0
    %1472 = vmatpush1.msra.mxu0 0.0
    %1473 = vmatprep.subr.mxu0 0.0
    %1474 = vmatpush1.msra.mxu0 0.0
    %1475 = vmatprep.subr.mxu0 0.0
    %1476 = vmatpush1.msra.mxu0 0.0
    %1477 = vmatprep.mubr.f32.mxu0 0.0
    %1478 = vmatmul.mubr.f32.gmra.mrb[0].mxu0 %v1408
    %v1479 = vpop.f32.mrb[0].mxu0
    %v1480 = vadd.f32 0.0, %v1479
    %v1481 = vpop.f32.mrb[0].mxu0
    %1482 = vmatprep.mubr.f32.mxu0 0.0
    %1483 = vmatmul.mubr.f32.gmra.mrb[0].mxu0 %v1411
    %v1484 = vpop.f32.mrb[0].mxu0
    %v1485 = vadd.f32 0.0, %v1484
    %v1486 = vpop.f32.mrb[0].mxu0
    %1487 = vdwg.mxu0
    %vm1488 = vcmask 64512
    %1489 = vst.msk [vmem:[%s10] sm:$0xff] %vm1488, %v1480
    %1490 = vst.msk [vmem:[%s10 + $0x8] sm:$0xff] %vm1488, %v1485
    // Predicated region
    $region50: #{tpu_custom_call.1} parent=1 // pred_check
      _
    $region51: #{tpu_custom_call.1} parent=1 // pred_check_branch
      %1492 = sbr.rel (0) target = $region53
    $region52: #{tpu_custom_call.1} parent=1 // pred_region
      %s1494 = ssub.s32 256, 256
      %1495 = vsyncadd [#allocation4], %s1494
      %s1496 = sshll.u32 [#allocation8], 4
      %s1497 = int_to_ptr.vmem [resolvable:$true] %s1496
      %1502 = dma.vmem_to_hbm [thread:$0]  %s1497, 256, %s9, [#allocation4], 32, 32, 2
    $region53: #{tpu_custom_call.1} parent=1 // pred_fallthru
      _
    // Predicated region
    $region54: #{tpu_custom_call.1} parent=1 // pred_check
      _
    $region55: #{tpu_custom_call.1} parent=1 // pred_check_branch
      %1504 = sbr.rel (0) target = $region57
    $region56: #{tpu_custom_call.1} parent=1 // pred_region
      _
    $region57: #{tpu_custom_call.1} parent=1 // pred_fallthru
      _
    // Predicated region
    $region58: #{tpu_custom_call.1} parent=1 // pred_check
      _
    $region59: #{tpu_custom_call.1} parent=1 // pred_check_branch
      %1506 = sbr.rel (0) target = $region61
    $region60: #{tpu_custom_call.1} parent=1 // pred_region
      %1507 = dma.done [#allocation4], 256
    $region61: #{tpu_custom_call.1} parent=1 // pred_fallthru
      _
    // Predicated region
    $region62: #{tpu_custom_call.1} parent=1 // pred_check
      _
    $region63: #{tpu_custom_call.1} parent=1 // pred_check_branch
      %1509 = sbr.rel (0) target = $region65
    $region64: #{tpu_custom_call.1} parent=1 // pred_region
      _
    $region65: #{tpu_custom_call.1} parent=1 // pred_fallthru
      _
    %1510 = vsyncpa [#allocation3], 1
    %1511 = vsyncpa [#allocation6], 1
    %1512 = vsyncpa [#allocation4], 1

</llo_original>
